<compile_context>
chip_gen: v7x
topology: tpu7x:2x2x1
jax: 0.10.0
libtpu: 0.0.40
codegen_flags: <defaults>
</compile_context>

<pallas_src>
import jax
import jax.numpy as jnp
from jax.experimental import pallas as pl
from jax.experimental.pallas import tpu as pltpu


def _gal_kernel(x_ref, w_ref, a_ref, idx_i_ref, idx_j_ref, o_ref, wh_ref, s_ref):
    # x_ref:     (1, C, N)   f32  -- full batch-element features (DMA'd once per b)
    # w_ref:     (C, C)      f32  -- W conv weight, W[c_out, c_in]
    # a_ref:     (2, C)      f32  -- row 0 = a[:C] (whi weights), row 1 = a[C:] (whj)
    # idx_i_ref: (1, TN, K)  i32  -- edge_index[1] node tile
    # idx_j_ref: (1, TN, K)  i32  -- edge_index[0] node tile
    # o_ref:     (1, C, TN)  f32
    # wh_ref:    (C, N)      f32 scratch, resident across node tiles
    # s_ref:     (2, N)      f32 scratch: row 0 = si, row 1 = sj
    t = pl.program_id(1)

    # Compute wh = W @ x and its attention projections once per batch element.
    @pl.when(t == 0)
    def _():
        wh = jnp.dot(w_ref[...], x_ref[0], preferred_element_type=jnp.float32)    # (C, N)
        wh_ref[...] = wh
        s_ref[...] = jnp.dot(a_ref[...], wh, preferred_element_type=jnp.float32)  # (2, N)

    C, N = wh_ref.shape
    TN, K = idx_i_ref.shape[1], idx_i_ref.shape[2]

    idx_i = idx_i_ref[0]                                       # (TN, K) int32
    idx_j = idx_j_ref[0]
    # Small (1, 1, N) iota; comparisons broadcast it across (TN, K, N).
    node_ids = jax.lax.broadcasted_iota(jnp.int32, (1, 1, N), 2)
    mask_i = idx_i[:, :, None] == node_ids                     # (TN, K, N) bool
    mask_j = idx_j[:, :, None] == node_ids

    s = s_ref[...]                                             # (2, N)
    si = s[0:1].reshape(1, 1, N)
    sj = s[1:2].reshape(1, 1, N)

    # Eij = LeakyReLU_0.2( si[idx_i] + sj[idx_j] ) -- the two scalar gathers are
    # fused into a single select-add and ONE cross-lane (XLU) reduction.
    e = jnp.sum(jnp.where(mask_i, si, 0.0) + jnp.where(mask_j, sj, 0.0),
                axis=-1)                                       # (TN, K)
    e = jnp.where(e > 0, e, 0.2 * e)

    # Softmax over the K neighbors of each node (exact division to match ref).
    m = jnp.max(e, axis=-1, keepdims=True)
    p = jnp.exp(e - m)
    aij = p * pl.reciprocal(jnp.sum(p, axis=-1, keepdims=True), approx=False)  # (TN, K)

    # TODO(synk): F.dropout(Aij, 0.2, training=True) is stochastic; eval-mode
    # (identity) semantics are used here.

    # Fold attention into the adjacency: S[t, m] = sum_k aij[t,k] * [idx_j[t,k]==m]
    S = jnp.sum(jnp.where(mask_j, aij[:, :, None], 0.0), axis=1)               # (TN, N)

    # out[c, t] = sum_m wh[c, m] * S[t, m]   ("NT" matmul on the MXU)
    out = jax.lax.dot_general(wh_ref[...], S, (((1,), (1,)), ((), ())),
                              preferred_element_type=jnp.float32)              # (C, TN)
    o_ref[0] = out.astype(o_ref.dtype)


def _vmem_limit_bytes(C, N, K, tn):
    f32 = 4
    # double-buffered pipeline inputs/outputs
    io = (2 * (C * N * f32) + 4 * (tn * K * 4) + 2 * (C * tn * f32)
          + 2 * (C * C + 2 * C) * f32)
    scratch = (C * N + 2 * N) * f32
    # transient 3-D intermediates in the body (masks / selects / adjacency fold)
    interm = 6 * tn * K * N * f32
    est = 2 * (io + scratch + interm)
    return int(min(max(est, 32 << 20), 64 << 20))


def graph_conv2d_gal(x_nchw, edge_index, w_conv, a_conv, *, tile_n=128):
    """GraphConv2d(conv='GAL') forward (eval mode).

    x_nchw:     (B, C, N, 1) float32   (PyTorch NCHW layout, W==1)
    edge_index: (2, B, N, K) int32
    w_conv:     (C, C, 1, 1) float32   (nn.Conv2d weight, no bias)
    a_conv:     (1, 2C, 1, 1) float32  (nn.Conv2d weight, no bias)
    returns:    (B, C, N, 1) float32
    """
    B, C, N, _ = x_nchw.shape
    K = edge_index.shape[-1]
    if N % tile_n != 0:
        tile_n = N                       # fallback: single node tile
    tile_n = min(tile_n, N)
    nt = N // tile_n

    x_bcn = x_nchw[..., 0]               # (B, C, N) -- squeeze, no data movement
    idx_j = edge_index[0].astype(jnp.int32)   # (B, N, K)
    idx_i = edge_index[1].astype(jnp.int32)   # (B, N, K)
    w2 = w_conv.reshape(C, C)            # (C_out, C_in)
    a2 = a_conv.reshape(2, C)            # row 0 = a[:C], row 1 = a[C:]

    flops = int(B * (2 * C * C * N       # wh = W @ x
                     + 4 * C * N         # si / sj projections
                     + 4 * N * K * N     # scalar gathers + adjacency fold
                     + 2 * C * N * N))   # out = wh @ S^T
    bytes_accessed = int(4 * (2 * B * C * N + 2 * B * N * K + C * C + 2 * C))
    cost = pl.CostEstimate(flops=flops, transcendentals=int(B * N * K),
                           bytes_accessed=bytes_accessed)

    out_bcn = pl.pallas_call(
        _gal_kernel,
        out_shape=jax.ShapeDtypeStruct((B, C, N), jnp.float32),
        grid_spec=pltpu.PrefetchScalarGridSpec(
            num_scalar_prefetch=0,
            grid=(B, nt),
            in_specs=[
                pl.BlockSpec((1, C, N), lambda b, t: (b, 0, 0)),       # x (full per batch)
                pl.BlockSpec((C, C), lambda b, t: (0, 0)),             # W
                pl.BlockSpec((2, C), lambda b, t: (0, 0)),             # a
                pl.BlockSpec((1, tile_n, K), lambda b, t: (b, t, 0)),  # idx_i tile
                pl.BlockSpec((1, tile_n, K), lambda b, t: (b, t, 0)),  # idx_j tile
            ],
            out_specs=pl.BlockSpec((1, C, tile_n), lambda b, t: (b, 0, t)),
            scratch_shapes=[
                pltpu.VMEM((C, N), jnp.float32),   # wh, resident per batch element
                pltpu.VMEM((2, N), jnp.float32),   # si / sj, resident per batch element
            ],
        ),
        compiler_params=pltpu.CompilerParams(
            dimension_semantics=("parallel", "arbitrary"),
            vmem_limit_bytes=_vmem_limit_bytes(C, N, K, tile_n),
        ),
        cost_estimate=cost,
    )(x_bcn, w2, a2, idx_i, idx_j)

    # back to PyTorch layout (B, C, N, 1) -- free reshape, no transpose
    return out_bcn[..., None]


def _reference_gal(x_nchw, edge_index, w_conv, a_conv):
    """Pure-JAX reference mirroring the PyTorch GAL forward (eval mode)."""
    B, C, N, _ = x_nchw.shape
    K = edge_index.shape[-1]
    xs = x_nchw[..., 0]                                        # (B, C, N)
    wh = jnp.einsum('oc,bcn->bon', w_conv.reshape(C, C), xs)   # (B, C, N)

    def gather(z, idx):                                        # -> (B, C, N, K)
        idx_e = jnp.broadcast_to(idx.reshape(B, 1, N * K), (B, C, N * K))
        return jnp.take_along_axis(z, idx_e.astype(jnp.int32), axis=2).reshape(B, C, N, K)

    whi = gather(wh, edge_index[1])
    whj = gather(wh, edge_index[0])
    a_flat = a_conv.reshape(2 * C)
    e = (jnp.einsum('c,bcnk->bnk', a_flat[:C], whi)
         + jnp.einsum('c,bcnk->bnk', a_flat[C:], whj))         # (B, N, K)
    e = jnp.where(e > 0, e, 0.2 * e)
    e = e - jnp.max(e, axis=-1, keepdims=True)
    p = jnp.exp(e)
    aij = p / jnp.sum(p, axis=-1, keepdims=True)               # (B, N, K)
    out = jnp.einsum('bcnk,bnk->bcn', whj, aij)                # (B, C, N)
    return out[..., None]


if __name__ == "__main__":
    def run_case(B, C, N, K):
        key = jax.random.PRNGKey(0)
        k_x, k_w, k_a, k_e = jax.random.split(key, 4)
        x = jax.random.normal(k_x, (B, C, N, 1), dtype=jnp.float32)
        # Deterministic synthetic params (match nn.Conv2d weight shapes, no bias).
        w_conv = jax.random.normal(k_w, (C, C, 1, 1), dtype=jnp.float32) * 0.5
        a_conv = jax.random.normal(k_a, (1, 2 * C, 1, 1), dtype=jnp.float32) * 0.5
        edge_index = jax.random.randint(k_e, (2, B, N, K), 0, N, dtype=jnp.int32)

        out = jax.block_until_ready(graph_conv2d_gal(x, edge_index, w_conv, a_conv))
        ref = _reference_gal(x, edge_index, w_conv, a_conv)
        assert out.shape == (B, C, N, 1)
        err = float(jnp.max(jnp.abs(out - ref)))
        assert jnp.allclose(out, ref, rtol=1e-4, atol=1e-5), err

    run_case(2, 4, 16, 8)      # single node tile (tile_n == N)
    run_case(2, 8, 256, 8)     # multi-tile path: tile_n=128, 2 node tiles per batch
    print("KERNEL_OK")
</pallas_src>

<mosaic_0001>
module attributes {stable_mosaic.version = 11 : i64} {
  func.func @_gal_kernel(%arg0: i32, %arg1: i32, %arg2: memref<1x4x16xf32, #tpu.memory_space<vmem>>, %arg3: memref<4x4xf32, #tpu.memory_space<vmem>>, %arg4: memref<2x4xf32, #tpu.memory_space<vmem>>, %arg5: memref<1x16x8xi32, #tpu.memory_space<vmem>>, %arg6: memref<1x16x8xi32, #tpu.memory_space<vmem>>, %arg7: memref<1x4x16xf32, #tpu.memory_space<vmem>>, %arg8: memref<4x16xf32, #tpu.memory_space<vmem>>, %arg9: memref<2x16xf32, #tpu.memory_space<vmem>>) attributes {dimension_semantics = [#tpu.dimension_semantics<parallel>, #tpu.dimension_semantics<arbitrary>], iteration_bounds = array<i64: 2, 1>, scalar_prefetch = 0 : i64, scratch_operands = 2 : i64, tpu.core_type = #tpu.core_type<tc>, window_params = [{transform_indices = @transform_0, window_bounds = array<i64: 1, 4, 16>}, {pipeline_mode = #tpu.pipeline_mode<synchronous>, transform_indices = @transform_1, window_bounds = array<i64: 4, 4>}, {pipeline_mode = #tpu.pipeline_mode<synchronous>, transform_indices = @transform_2, window_bounds = array<i64: 2, 4>}, {transform_indices = @transform_3, window_bounds = array<i64: 1, 16, 8>}, {transform_indices = @transform_4, window_bounds = array<i64: 1, 16, 8>}, {transform_indices = @transform_5, window_bounds = array<i64: 1, 4, 16>}]} {
    %c0_i32 = arith.constant 0 : i32
    %0 = arith.cmpi eq, %arg1, %c0_i32 : i32
    %1 = arith.extui %0 : i1 to i32
    %c0_i32_0 = arith.constant 0 : i32
    %2 = arith.cmpi ne, %1, %c0_i32_0 : i32
    scf.if %2 {
      %c0_22 = arith.constant 0 : index
      %c0_23 = arith.constant 0 : index
      %57 = vector.load %arg3[%c0_22, %c0_23] : memref<4x4xf32, #tpu.memory_space<vmem>>, vector<4x4xf32>
      %c0_24 = arith.constant 0 : index
      %c0_25 = arith.constant 0 : index
      %c0_26 = arith.constant 0 : index
      %58 = vector.load %arg2[%c0_24, %c0_25, %c0_26] : memref<1x4x16xf32, #tpu.memory_space<vmem>>, vector<1x4x16xf32>
      %59 = vector.shape_cast %58 : vector<1x4x16xf32> to vector<4x16xf32>
      %cst_27 = arith.constant dense<0.000000e+00> : vector<4x16xf32>
      %60 = tpu.matmul %57, %59, %cst_27 {dimension_numbers = #tpu.dot_dimension_numbers<[1], [0], [0], [1], [0, 0, 1, 1], [], []>} : vector<4x4xf32>, vector<4x16xf32>, vector<4x16xf32> -> vector<4x16xf32>
      %c0_28 = arith.constant 0 : index
      %c0_29 = arith.constant 0 : index
      %61 = vector.load %arg8[%c0_28, %c0_29] : memref<4x16xf32, #tpu.memory_space<vmem>>, vector<4x16xf32>
      tpu.vector_store %arg8[%c0_28, %c0_29], %60 {strides = array<i32>} : memref<4x16xf32, #tpu.memory_space<vmem>>, vector<4x16xf32>,
      %c0_30 = arith.constant 0 : index
      %c0_31 = arith.constant 0 : index
      %62 = vector.load %arg4[%c0_30, %c0_31] : memref<2x4xf32, #tpu.memory_space<vmem>>, vector<2x4xf32>
      %cst_32 = arith.constant dense<0.000000e+00> : vector<2x16xf32>
      %63 = tpu.matmul %62, %60, %cst_32 {dimension_numbers = #tpu.dot_dimension_numbers<[1], [0], [0], [1], [0, 0, 1, 1], [], []>} : vector<2x4xf32>, vector<4x16xf32>, vector<2x16xf32> -> vector<2x16xf32>
      %c0_33 = arith.constant 0 : index
      %c0_34 = arith.constant 0 : index
      %64 = vector.load %arg9[%c0_33, %c0_34] : memref<2x16xf32, #tpu.memory_space<vmem>>, vector<2x16xf32>
      tpu.vector_store %arg9[%c0_33, %c0_34], %63 {strides = array<i32>} : memref<2x16xf32, #tpu.memory_space<vmem>>, vector<2x16xf32>,
    } else {
    }
    %c0 = arith.constant 0 : index
    %c0_1 = arith.constant 0 : index
    %c0_2 = arith.constant 0 : index
    %3 = vector.load %arg5[%c0, %c0_1, %c0_2] : memref<1x16x8xi32, #tpu.memory_space<vmem>>, vector<1x16x8xi32>
    %4 = vector.shape_cast %3 : vector<1x16x8xi32> to vector<16x8xi32>
    %c0_3 = arith.constant 0 : index
    %c0_4 = arith.constant 0 : index
    %c0_5 = arith.constant 0 : index
    %5 = vector.load %arg6[%c0_3, %c0_4, %c0_5] : memref<1x16x8xi32, #tpu.memory_space<vmem>>, vector<1x16x8xi32>
    %6 = vector.shape_cast %5 : vector<1x16x8xi32> to vector<16x8xi32>
    %7 = tpu.iota {dimensions = array<i32: 2>} : vector<1x1x16xi32>
    %8 = vector.shape_cast %4 : vector<16x8xi32> to vector<16x8x1xi32>
    %9 = vector.broadcast %8 : vector<16x8x1xi32> to vector<16x8x16xi32>
    %10 = vector.broadcast %7 : vector<1x1x16xi32> to vector<16x8x16xi32>
    %11 = arith.cmpi eq, %9, %10 : vector<16x8x16xi32>
    %12 = vector.shape_cast %6 : vector<16x8xi32> to vector<16x8x1xi32>
    %13 = vector.broadcast %12 : vector<16x8x1xi32> to vector<16x8x16xi32>
    %14 = vector.broadcast %7 : vector<1x1x16xi32> to vector<16x8x16xi32>
    %15 = arith.cmpi eq, %13, %14 : vector<16x8x16xi32>
    %c0_6 = arith.constant 0 : index
    %c0_7 = arith.constant 0 : index
    %16 = vector.load %arg9[%c0_6, %c0_7] : memref<2x16xf32, #tpu.memory_space<vmem>>, vector<2x16xf32>
    %17 = vector.extract_strided_slice %16 {offsets = [0, 0], sizes = [1, 16], strides = [1, 1]} : vector<2x16xf32> to vector<1x16xf32>
    %18 = vector.shape_cast %17 : vector<1x16xf32> to vector<1x1x16xf32>
    %19 = vector.extract_strided_slice %16 {offsets = [1, 0], sizes = [1, 16], strides = [1, 1]} : vector<2x16xf32> to vector<1x16xf32>
    %20 = vector.shape_cast %19 : vector<1x16xf32> to vector<1x1x16xf32>
    %cst = arith.constant 0.000000e+00 : f32
    %21 = vector.shape_cast %18 : vector<1x1x16xf32> to vector<1x1x16xf32>
    %22 = vector.broadcast %21 : vector<1x1x16xf32> to vector<16x8x16xf32>
    %23 = vector.broadcast %cst : f32 to vector<16x8x16xf32>
    %24 = arith.select %11, %22, %23 : vector<16x8x16xi1>, vector<16x8x16xf32>
    %cst_8 = arith.constant 0.000000e+00 : f32
    %25 = vector.shape_cast %20 : vector<1x1x16xf32> to vector<1x1x16xf32>
    %26 = vector.broadcast %25 : vector<1x1x16xf32> to vector<16x8x16xf32>
    %27 = vector.broadcast %cst_8 : f32 to vector<16x8x16xf32>
    %28 = arith.select %15, %26, %27 : vector<16x8x16xi1>, vector<16x8x16xf32>
    %29 = arith.addf %24, %28 : vector<16x8x16xf32>
    %cst_9 = arith.constant dense<0.000000e+00> : vector<16x8xf32>
    %30 = vector.multi_reduction <add>, %29, %cst_9 [2] : vector<16x8x16xf32> to vector<16x8xf32>
    %cst_10 = arith.constant 0.000000e+00 : f32
    %31 = vector.broadcast %cst_10 : f32 to vector<16x8xf32>
    %32 = arith.cmpf ogt, %30, %31 : vector<16x8xf32>
    %cst_11 = arith.constant 2.000000e-01 : f32
    %33 = vector.broadcast %cst_11 : f32 to vector<16x8xf32>
    %34 = arith.mulf %33, %30 : vector<16x8xf32>
    %35 = arith.select %32, %30, %34 : vector<16x8xi1>, vector<16x8xf32>
    %cst_12 = arith.constant dense<0xFF800000> : vector<16xf32>
    %36 = vector.multi_reduction <maximumf>, %35, %cst_12 [1] : vector<16x8xf32> to vector<16xf32>
    %37 = vector.shape_cast %36 : vector<16xf32> to vector<16x1xf32>
    %38 = vector.broadcast %37 : vector<16x1xf32> to vector<16x8xf32>
    %39 = arith.subf %35, %38 : vector<16x8xf32>
    %40 = math.exp %39 : vector<16x8xf32>
    %cst_13 = arith.constant dense<0.000000e+00> : vector<16xf32>
    %41 = vector.multi_reduction <add>, %40, %cst_13 [1] : vector<16x8xf32> to vector<16xf32>
    %42 = vector.shape_cast %41 : vector<16xf32> to vector<16x1xf32>
    %43 = tpu.reciprocal %42 : vector<16x1xf32> -> vector<16x1xf32>
    %44 = vector.broadcast %43 : vector<16x1xf32> to vector<16x8xf32>
    %45 = arith.mulf %40, %44 : vector<16x8xf32>
    %46 = vector.shape_cast %45 : vector<16x8xf32> to vector<16x8x1xf32>
    %cst_14 = arith.constant 0.000000e+00 : f32
    %47 = vector.shape_cast %46 : vector<16x8x1xf32> to vector<16x8x1xf32>
    %48 = vector.broadcast %47 : vector<16x8x1xf32> to vector<16x8x16xf32>
    %49 = vector.broadcast %cst_14 : f32 to vector<16x8x16xf32>
    %50 = arith.select %15, %48, %49 : vector<16x8x16xi1>, vector<16x8x16xf32>
    %cst_15 = arith.constant dense<0.000000e+00> : vector<16x16xf32>
    %51 = vector.multi_reduction <add>, %50, %cst_15 [1] : vector<16x8x16xf32> to vector<16x16xf32>
    %c0_16 = arith.constant 0 : index
    %c0_17 = arith.constant 0 : index
    %52 = vector.load %arg8[%c0_16, %c0_17] : memref<4x16xf32, #tpu.memory_space<vmem>>, vector<4x16xf32>
    %cst_18 = arith.constant dense<0.000000e+00> : vector<4x16xf32>
    %53 = tpu.matmul %52, %51, %cst_18 {dimension_numbers = #tpu.dot_dimension_numbers<[1], [1], [0], [0], [0, 0, 1, 0], [], []>} : vector<4x16xf32>, vector<16x16xf32>, vector<4x16xf32> -> vector<4x16xf32>
    %c0_19 = arith.constant 0 : index
    %c0_20 = arith.constant 0 : index
    %c0_21 = arith.constant 0 : index
    %54 = vector.load %arg7[%c0_19, %c0_20, %c0_21] : memref<1x4x16xf32, #tpu.memory_space<vmem>>, vector<1x4x16xf32>
    %55 = vector.shape_cast %54 : vector<1x4x16xf32> to vector<4x16xf32>
    %56 = vector.shape_cast %53 : vector<4x16xf32> to vector<1x4x16xf32>
    tpu.vector_store %arg7[%c0_19, %c0_20, %c0_21], %56 {strides = array<i32>} : memref<1x4x16xf32, #tpu.memory_space<vmem>>, vector<1x4x16xf32>,
    return
  }
  func.func @transform_0(%arg0: i32, %arg1: i32) -> (i32, i32, i32) {
    %c0_i32 = arith.constant 0 : i32
    %c0_i32_0 = arith.constant 0 : i32
    %c0_i32_1 = arith.constant 0 : i32
    return %arg0, %c0_i32, %c0_i32_0 : i32, i32, i32
  }
  func.func @transform_1(%arg0: i32, %arg1: i32) -> (i32, i32) {
    %c0_i32 = arith.constant 0 : i32
    %c0_i32_0 = arith.constant 0 : i32
    %c0_i32_1 = arith.constant 0 : i32
    return %c0_i32, %c0_i32_0 : i32, i32
  }
  func.func @transform_2(%arg0: i32, %arg1: i32) -> (i32, i32) {
    %c0_i32 = arith.constant 0 : i32
    %c0_i32_0 = arith.constant 0 : i32
    %c0_i32_1 = arith.constant 0 : i32
    return %c0_i32, %c0_i32_0 : i32, i32
  }
  func.func @transform_3(%arg0: i32, %arg1: i32) -> (i32, i32, i32) {
    %c0_i32 = arith.constant 0 : i32
    %c0_i32_0 = arith.constant 0 : i32
    return %arg0, %arg1, %c0_i32 : i32, i32, i32
  }
  func.func @transform_4(%arg0: i32, %arg1: i32) -> (i32, i32, i32) {
    %c0_i32 = arith.constant 0 : i32
    %c0_i32_0 = arith.constant 0 : i32
    return %arg0, %arg1, %c0_i32 : i32, i32, i32
  }
  func.func @transform_5(%arg0: i32, %arg1: i32) -> (i32, i32, i32) {
    %c0_i32 = arith.constant 0 : i32
    %c0_i32_0 = arith.constant 0 : i32
    return %arg0, %c0_i32, %arg1 : i32, i32, i32
  }
}

</mosaic_0001>

<llo_original>
// kernel: tpu_custom_call.1
$region0: #{tpu_custom_call.1}
  #allocation0 [shape = 'u32[]', space=smem, size = 0x4, offset = 0x4, fixed_abs, tag = 'smem constant byte address 0x4 - core index']
  #allocation1 [shape = 'u32[144,128]{1,0:T(1,128)}', space=vmem, size = 0x12000, scoped, tag = 'internal scratch']
  #allocation2 [shape = 'f32[4,16]{1,0:T(4,128)}', space=vmem, size = 0x800, scoped, tag = 'scratch operand']
  #allocation3 [shape = 'f32[2,16]{1,0:T(2,128)}', space=vmem, size = 0x400, scoped, tag = 'scratch operand']
  %s0 = inlined_call_operand.vmem [shape: f32[2,4,16], index: 0, kind: input, shape index: {}]
  %s1 = inlined_call_operand.vmem [shape: f32[4,4], index: 1, kind: input, shape index: {}]
  %s2 = inlined_call_operand.vmem [shape: f32[2,4], index: 2, kind: input, shape index: {}]
  %s3 = inlined_call_operand.vmem [shape: s32[2,16,8], index: 3, kind: input, shape index: {}]
  %s4 = inlined_call_operand.vmem [shape: s32[2,16,8], index: 4, kind: input, shape index: {}]
  %s5 = inlined_call_operand.hbm [shape: f32[2,4,16], index: 5, kind: output, shape index: {}]
  %s6 = sld [smem:[#allocation0]]
  $region57: #{tpu_custom_call.1} parent=0
    _
  %s8 = ssub.s32 1, %s6
  %s9 = scalar_select 0, %s8, %s6
  $region1: #{tpu_custom_call.1} parent=0
    #allocation4 [shape = 'u8[4096]{0}', space=vmem, size = 0x1000, scoped, tag = 'output window, operand 0']
    #allocation5 [shape = 's32[2]{0}', space=sflag, size = 0x8, scoped, tag = 'scoped memory for tpu_custom_call.1']
    %10 = vsyncpa [#allocation5], 0
    %s11 = scalar_lea.sflag [#allocation5], 1
    %12 = vsyncpa %s11, 0
    loop: start=0, step=1, limit=4
    $region2: #{tpu_custom_call.1} parent=1 // loop_pre_header
      _
    $region3: #{tpu_custom_call.1} parent=1 // loop_header
      %s14 = sphi 0, %s18
      %p15 = scmp.ge.s32.totalorder %s14, 4
      %s21 = sphi 0, %s33
      %s22 = sphi 0, %s29
      %s23 = sphi 0, %s21
      %s24 = sphi 0, %s22
      %s25 = sphi 0, %s23
      %s26 = sphi 0, %s24
      %s36 = sphi 0, %s38
      %s39 = sphi 0, %s36
      %s40 = sphi 0, %s39
      %s56 = sphi 0, %s40
      %s60 = sphi 0, %s60
      %s62 = sphi 0, %s60
      %s63 = sphi 0, %s62
      %s77 = sphi 0, %s63
      %s81 = sphi 0, %s81
      %s83 = sphi 0, %s81
      %s84 = sphi 0, %s83
      %s98 = sphi 0, %s84
      %s106 = sphi 0, %s108
      %s109 = sphi 0, %s106
      %s110 = sphi 0, %s109
      %s126 = sphi 0, %s110
      %s134 = sphi 0, %s136
      %s137 = sphi 0, %s134
      %s138 = sphi 0, %s137
      %s154 = sphi 0, %s138
      %s162 = sphi 0, %s164
      %s165 = sphi 0, %s162
      %s166 = sphi 0, %s165
      %s182 = sphi 0, %s166
    $region4: #{tpu_custom_call.1} parent=1 // loop_header_branch
      %17 = sbr.rel (%p15) target = $region8
    $region5: #{tpu_custom_call.1} parent=1 // loop_body
      %s19 = ssub.s32 %s14, 1
      %s20 = ssub.s32 %s14, 2
      %s27 = sadd.s32 1, %s22
      %p28 = scmp.ge.s32.totalorder %s27, 1
      %s29 = scalar_select %p28, 0, %s27
      %s30 = sadd.s32 1, %s21
      %s31 = scalar_select %p28, %s30, %s21
      %p32 = scmp.ge.s32.totalorder %s31, 2
      %s33 = scalar_select %p32, 0, %s31
      %s34 = ssub.s32 %s21, %s33
      %p35 = scmp.eq.s32.totalorder %s34, 0
      %s37 = sadd.s32 %s36, 1
      %s38 = scalar_select %p35, %s36, %s37
      %p41 = pneg %p35
      %p42 = scmp.eq.s32.totalorder %s14, 1
      %p43 = por %p41, %p42
      %p44 = scmp.ne.s32.totalorder %s36, %s39
      %p45 = scmp.eq.s32.totalorder %s14, 0
      %p46 = por %p44, %p45
      %p47 = scmp.ne.s32.totalorder %s36, %s39
      %p48 = scmp.eq.s32.totalorder %s19, 1
      %p49 = por %p47, %p48
      %p50 = scmp.ne.s32.totalorder %s39, %s40
      %p51 = scmp.eq.s32.totalorder %s19, 0
      %p52 = por %p50, %p51
      %p53 = scmp.ne.s32.totalorder %s39, %s40
      %p54 = scmp.eq.s32.totalorder %s20, 1
      %p55 = por %p53, %p54
      %p57 = scmp.ne.s32.totalorder %s40, %s56
      %p58 = scmp.eq.s32.totalorder %s20, 0
      %p59 = por %p57, %p58
      %s61 = sadd.s32 %s60, 1
      %p64 = scmp.eq.s32.totalorder %s14, 1
      %p65 = scmp.ne.s32.totalorder %s60, %s62
      %p66 = scmp.eq.s32.totalorder %s14, 0
      %p67 = por %p65, %p66
      %p68 = scmp.ne.s32.totalorder %s60, %s62
      %p69 = scmp.eq.s32.totalorder %s19, 1
      %p70 = por %p68, %p69
      %p71 = scmp.ne.s32.totalorder %s62, %s63
      %p72 = scmp.eq.s32.totalorder %s19, 0
      %p73 = por %p71, %p72
      %p74 = scmp.ne.s32.totalorder %s62, %s63
      %p75 = scmp.eq.s32.totalorder %s20, 1
      %p76 = por %p74, %p75
      %p78 = scmp.ne.s32.totalorder %s63, %s77
      %p79 = scmp.eq.s32.totalorder %s20, 0
      %p80 = por %p78, %p79
      %s82 = sadd.s32 %s81, 1
      %p85 = scmp.eq.s32.totalorder %s14, 1
      %p86 = scmp.ne.s32.totalorder %s81, %s83
      %p87 = scmp.eq.s32.totalorder %s14, 0
      %p88 = por %p86, %p87
      %p89 = scmp.ne.s32.totalorder %s81, %s83
      %p90 = scmp.eq.s32.totalorder %s19, 1
      %p91 = por %p89, %p90
      %p92 = scmp.ne.s32.totalorder %s83, %s84
      %p93 = scmp.eq.s32.totalorder %s19, 0
      %p94 = por %p92, %p93
      %p95 = scmp.ne.s32.totalorder %s83, %s84
      %p96 = scmp.eq.s32.totalorder %s20, 1
      %p97 = por %p95, %p96
      %p99 = scmp.ne.s32.totalorder %s84, %s98
      %p100 = scmp.eq.s32.totalorder %s20, 0
      %p101 = por %p99, %p100
      %s102 = ssub.s32 %s21, %s33
      %s103 = ssub.s32 %s22, %s29
      %s104 = sor.u32 %s102, %s103
      %p105 = scmp.eq.s32.totalorder %s104, 0
      %s107 = sadd.s32 %s106, 1
      %s108 = scalar_select %p105, %s106, %s107
      %p111 = pneg %p105
      %p112 = scmp.eq.s32.totalorder %s14, 1
      %p113 = por %p111, %p112
      %p114 = scmp.ne.s32.totalorder %s106, %s109
      %p115 = scmp.eq.s32.totalorder %s14, 0
      %p116 = por %p114, %p115
      %p117 = scmp.ne.s32.totalorder %s106, %s109
      %p118 = scmp.eq.s32.totalorder %s19, 1
      %p119 = por %p117, %p118
      %p120 = scmp.ne.s32.totalorder %s109, %s110
      %p121 = scmp.eq.s32.totalorder %s19, 0
      %p122 = por %p120, %p121
      %p123 = scmp.ne.s32.totalorder %s109, %s110
      %p124 = scmp.eq.s32.totalorder %s20, 1
      %p125 = por %p123, %p124
      %p127 = scmp.ne.s32.totalorder %s110, %s126
      %p128 = scmp.eq.s32.totalorder %s20, 0
      %p129 = por %p127, %p128
      %s130 = ssub.s32 %s21, %s33
      %s131 = ssub.s32 %s22, %s29
      %s132 = sor.u32 %s130, %s131
      %p133 = scmp.eq.s32.totalorder %s132, 0
      %s135 = sadd.s32 %s134, 1
      %s136 = scalar_select %p133, %s134, %s135
      %p139 = pneg %p133
      %p140 = scmp.eq.s32.totalorder %s14, 1
      %p141 = por %p139, %p140
      %p142 = scmp.ne.s32.totalorder %s134, %s137
      %p143 = scmp.eq.s32.totalorder %s14, 0
      %p144 = por %p142, %p143
      %p145 = scmp.ne.s32.totalorder %s134, %s137
      %p146 = scmp.eq.s32.totalorder %s19, 1
      %p147 = por %p145, %p146
      %p148 = scmp.ne.s32.totalorder %s137, %s138
      %p149 = scmp.eq.s32.totalorder %s19, 0
      %p150 = por %p148, %p149
      %p151 = scmp.ne.s32.totalorder %s137, %s138
      %p152 = scmp.eq.s32.totalorder %s20, 1
      %p153 = por %p151, %p152
      %p155 = scmp.ne.s32.totalorder %s138, %s154
      %p156 = scmp.eq.s32.totalorder %s20, 0
      %p157 = por %p155, %p156
      %s158 = ssub.s32 %s21, %s33
      %s159 = ssub.s32 %s22, %s29
      %s160 = sor.u32 %s158, %s159
      %p161 = scmp.eq.s32.totalorder %s160, 0
      %s163 = sadd.s32 %s162, 1
      %s164 = scalar_select %p161, %s162, %s163
      %p167 = pneg %p161
      %p168 = scmp.eq.s32.totalorder %s14, 1
      %p169 = por %p167, %p168
      %p170 = scmp.ne.s32.totalorder %s162, %s165
      %p171 = scmp.eq.s32.totalorder %s14, 0
      %p172 = por %p170, %p171
      %p173 = scmp.ne.s32.totalorder %s162, %s165
      %p174 = scmp.eq.s32.totalorder %s19, 1
      %p175 = por %p173, %p174
      %p176 = scmp.ne.s32.totalorder %s165, %s166
      %p177 = scmp.eq.s32.totalorder %s19, 0
      %p178 = por %p176, %p177
      %p179 = scmp.ne.s32.totalorder %s165, %s166
      %p180 = scmp.eq.s32.totalorder %s20, 1
      %p181 = por %p179, %p180
      %p183 = scmp.ne.s32.totalorder %s166, %s182
      %p184 = scmp.eq.s32.totalorder %s20, 0
      %p185 = por %p183, %p184
      %p186 = scmp.le.s32.totalorder 1, %s14
      %p187 = scmp.lt.s32.totalorder %s14, 3
      %p188 = pnand %p186, %p187
      %p189 = pneg %p188
      // Predicated region
      $region9: #{tpu_custom_call.1} parent=5 // pred_check
        _
      $region10: #{tpu_custom_call.1} parent=5 // pred_check_branch
        %191 = sbr.rel (%p188) target = $region12
      $region11: #{tpu_custom_call.1} parent=5 // pred_region
        %s192 = ssub.s32 %s14, 1
        // Predicated region
        $region13: #{tpu_custom_call.1} parent=11 // pred_check
          %p193 = pneg %p73
        $region14: #{tpu_custom_call.1} parent=11 // pred_check_branch
          %195 = sbr.rel (%p193) target = $region16
        $region15: #{tpu_custom_call.1} parent=11 // pred_region
          _
        $region16: #{tpu_custom_call.1} parent=11 // pred_fallthru
          _
        // Predicated region
        $region17: #{tpu_custom_call.1} parent=11 // pred_check
          %p196 = pneg %p94
        $region18: #{tpu_custom_call.1} parent=11 // pred_check_branch
          %198 = sbr.rel (%p196) target = $region20
        $region19: #{tpu_custom_call.1} parent=11 // pred_region
          _
        $region20: #{tpu_custom_call.1} parent=11 // pred_fallthru
          _
      $region12: #{tpu_custom_call.1} parent=5 // pred_fallthru
        _
      %p199 = scmp.lt.s32.totalorder %s14, 2
      // Predicated region
      $region21: #{tpu_custom_call.1} parent=5 // pred_check
        %p200 = pneg %p199
      $region22: #{tpu_custom_call.1} parent=5 // pred_check_branch
        %202 = sbr.rel (%p200) target = $region24
      $region23: #{tpu_custom_call.1} parent=5 // pred_region
        // Predicated region
        $region25: #{tpu_custom_call.1} parent=23 // pred_check
          %p203 = pneg %p46
        $region26: #{tpu_custom_call.1} parent=23 // pred_check_branch
          %205 = sbr.rel (%p203) target = $region28
        $region27: #{tpu_custom_call.1} parent=23 // pred_region
          %p206 = scmp.lt.s32.totalorder %s21, 1
          %s207 = scalar_select %p206, %s21, 1
          %s208 = smul.addr %s207, 4
          %s209 = scalar_lea.vmem %s0, %s208
        $region28: #{tpu_custom_call.1} parent=23 // pred_fallthru
          _
        // Predicated region
        $region29: #{tpu_custom_call.1} parent=23 // pred_check
          %p210 = pneg %p116
        $region30: #{tpu_custom_call.1} parent=23 // pred_check_branch
          %212 = sbr.rel (%p210) target = $region32
        $region31: #{tpu_custom_call.1} parent=23 // pred_region
          %s213 = smul.u32 2, %s22
          %p214 = scmp.lt.s32.totalorder %s21, 1
          %s215 = scalar_select %p214, %s21, 1
          %p216 = scmp.lt.s32.totalorder %s213, 1
          %s217 = scalar_select %p216, %s213, 1
          %s218 = smul.addr %s215, 2
          %s219 = sadd.s32 %s217, %s218
          %s220 = smul.addr %s219, 8
          %s221 = scalar_lea.vmem %s3, %s220
          %s222 = smul.u32 2, %s22
        $region32: #{tpu_custom_call.1} parent=23 // pred_fallthru
          _
        // Predicated region
        $region33: #{tpu_custom_call.1} parent=23 // pred_check
          %p223 = pneg %p144
        $region34: #{tpu_custom_call.1} parent=23 // pred_check_branch
          %225 = sbr.rel (%p223) target = $region36
        $region35: #{tpu_custom_call.1} parent=23 // pred_region
          %s226 = smul.u32 2, %s22
          %p227 = scmp.lt.s32.totalorder %s21, 1
          %s228 = scalar_select %p227, %s21, 1
          %p229 = scmp.lt.s32.totalorder %s226, 1
          %s230 = scalar_select %p229, %s226, 1
          %s231 = smul.addr %s228, 2
          %s232 = sadd.s32 %s230, %s231
          %s233 = smul.addr %s232, 8
          %s234 = scalar_lea.vmem %s4, %s233
          %s235 = smul.u32 2, %s22
        $region36: #{tpu_custom_call.1} parent=23 // pred_fallthru
          _
      $region24: #{tpu_custom_call.1} parent=5 // pred_fallthru
        _
      %p236 = scmp.le.s32.totalorder 1, %s14
      %p237 = scmp.lt.s32.totalorder %s14, 3
      %p238 = pnand %p236, %p237
      %p239 = pneg %p238
      // Predicated region
      $region37: #{tpu_custom_call.1} parent=5 // pred_check
        _
      $region38: #{tpu_custom_call.1} parent=5 // pred_check_branch
        %241 = sbr.rel (%p238) target = $region40
      $region39: #{tpu_custom_call.1} parent=5 // pred_region
        %s242 = ssub.s32 %s14, 1
        %p243 = scmp.lt.s32.totalorder %s23, 1
        %s244 = scalar_select %p243, %s23, 1
        %s245 = smul.addr %s244, 4
        %s246 = scalar_lea.vmem %s0, %s245
        %p247 = pneg %p52
        %p248 = pneg %p49
        %p249 = pneg %p73
        %p250 = pneg %p70
        %p251 = pneg %p94
        %p252 = pneg %p91
        %s253 = smul.u32 2, %s24
        %p254 = scmp.lt.s32.totalorder %s23, 1
        %s255 = scalar_select %p254, %s23, 1
        %p256 = scmp.lt.s32.totalorder %s253, 1
        %s257 = scalar_select %p256, %s253, 1
        %s258 = smul.addr %s255, 2
        %s259 = sadd.s32 %s257, %s258
        %s260 = smul.addr %s259, 8
        %s261 = scalar_lea.vmem %s3, %s260
        %p262 = pneg %p122
        %p263 = pneg %p119
        %s264 = smul.u32 2, %s24
        %p265 = scmp.lt.s32.totalorder %s23, 1
        %s266 = scalar_select %p265, %s23, 1
        %p267 = scmp.lt.s32.totalorder %s264, 1
        %s268 = scalar_select %p267, %s264, 1
        %s269 = smul.addr %s266, 2
        %s270 = sadd.s32 %s268, %s269
        %s271 = smul.addr %s270, 8
        %s272 = scalar_lea.vmem %s4, %s271
        %p273 = pneg %p150
        %p274 = pneg %p147
        %p275 = pneg %p178
        %p276 = pneg %p175
        %s277 = sand.u32 %s165, 1
        %s278 = scalar_lea.sflag [#allocation5], %s277
        %s279 = sand.u32 %s165, 1
        %s280 = smul.addr %s279, 4
        %s281 = scalar_lea.vmem [#allocation4], %s280
        %p282 = scmp.lt.s32.totalorder %s23, 1
        %s283 = scalar_select %p282, %s23, 1
        %s284 = smul.addr %s283, 4
        %s285 = scalar_lea.vmem %s0, %s284
        %s286 = smul.u32 2, %s24
        %p287 = scmp.lt.s32.totalorder %s23, 1
        %s288 = scalar_select %p287, %s23, 1
        %p289 = scmp.lt.s32.totalorder %s286, 1
        %s290 = scalar_select %p289, %s286, 1
        %s291 = smul.addr %s288, 2
        %s292 = sadd.s32 %s290, %s291
        %s293 = smul.addr %s292, 8
        %s294 = scalar_lea.vmem %s3, %s293
        %s295 = smul.u32 2, %s24
        %s296 = smul.u32 2, %s24
        %p297 = scmp.lt.s32.totalorder %s23, 1
        %s298 = scalar_select %p297, %s23, 1
        %p299 = scmp.lt.s32.totalorder %s296, 1
        %s300 = scalar_select %p299, %s296, 1
        %s301 = smul.addr %s298, 2
        %s302 = sadd.s32 %s300, %s301
        %s303 = smul.addr %s302, 8
        %s304 = scalar_lea.vmem %s4, %s303
        %s305 = smul.u32 2, %s24
        %p306 = scmp.eq.s32.totalorder %s24, 0
        // Predicated region
        $region41: #{tpu_custom_call.1} parent=39 // pred_check
          %p307 = pneg %p306
        $region42: #{tpu_custom_call.1} parent=39 // pred_check_branch
          %309 = sbr.rel (%p307) target = $region44
        $region43: #{tpu_custom_call.1} parent=39 // pred_region
          %v310 = vld [vmem:[%s1] sm:$0xf]
          %v311 = vld [vmem:[%s285] sm:$0xf]
          %vm312 = vcmask 31744
          %v314 = vsel %vm312, %v310, 0
          %vm316 = vcmask 1043456
          %v318 = vsel %vm316, %v311, 0
          %320 = vmatprep.subr.mxu0 0.0
          %321 = vmatpush1.msra.mxu0 %v318
          %322 = vmatprep.subr.mxu0 0.0
          %323 = vmatpush1.msra.mxu0 0.0
          %324 = vmatprep.subr.mxu0 0.0
          %325 = vmatpush1.msra.mxu0 0.0
          %326 = vmatprep.subr.mxu0 0.0
          %327 = vmatpush1.msra.mxu0 0.0
          %328 = vmatprep.subr.mxu0 0.0
          %329 = vmatpush1.msra.mxu0 0.0
          %330 = vmatprep.subr.mxu0 0.0
          %331 = vmatpush1.msra.mxu0 0.0
          %332 = vmatprep.subr.mxu0 0.0
          %333 = vmatpush1.msra.mxu0 0.0
          %334 = vmatprep.subr.mxu0 0.0
          %335 = vmatpush1.msra.mxu0 0.0
          %336 = vmatprep.subr.mxu0 0.0
          %337 = vmatpush1.msra.mxu0 0.0
          %338 = vmatprep.subr.mxu0 0.0
          %339 = vmatpush1.msra.mxu0 0.0
          %340 = vmatprep.subr.mxu0 0.0
          %341 = vmatpush1.msra.mxu0 0.0
          %342 = vmatprep.subr.mxu0 0.0
          %343 = vmatpush1.msra.mxu0 0.0
          %344 = vmatprep.subr.mxu0 0.0
          %345 = vmatpush1.msra.mxu0 0.0
          %346 = vmatprep.subr.mxu0 0.0
          %347 = vmatpush1.msra.mxu0 0.0
          %348 = vmatprep.subr.mxu0 0.0
          %349 = vmatpush1.msra.mxu0 0.0
          %350 = vmatprep.subr.mxu0 0.0
          %351 = vmatpush1.msra.mxu0 0.0
          %352 = vmatprep.subr.mxu0 0.0
          %353 = vmatpush1.msra.mxu0 0.0
          %354 = vmatprep.subr.mxu0 0.0
          %355 = vmatpush1.msra.mxu0 0.0
          %356 = vmatprep.subr.mxu0 0.0
          %357 = vmatpush1.msra.mxu0 0.0
          %358 = vmatprep.subr.mxu0 0.0
          %359 = vmatpush1.msra.mxu0 0.0
          %360 = vmatprep.subr.mxu0 0.0
          %361 = vmatpush1.msra.mxu0 0.0
          %362 = vmatprep.subr.mxu0 0.0
          %363 = vmatpush1.msra.mxu0 0.0
          %364 = vmatprep.subr.mxu0 0.0
          %365 = vmatpush1.msra.mxu0 0.0
          %366 = vmatprep.subr.mxu0 0.0
          %367 = vmatpush1.msra.mxu0 0.0
          %368 = vmatprep.subr.mxu0 0.0
          %369 = vmatpush1.msra.mxu0 0.0
          %370 = vmatprep.subr.mxu0 0.0
          %371 = vmatpush1.msra.mxu0 0.0
          %372 = vmatprep.subr.mxu0 0.0
          %373 = vmatpush1.msra.mxu0 0.0
          %374 = vmatprep.subr.mxu0 0.0
          %375 = vmatpush1.msra.mxu0 0.0
          %376 = vmatprep.subr.mxu0 0.0
          %377 = vmatpush1.msra.mxu0 0.0
          %378 = vmatprep.subr.mxu0 0.0
          %379 = vmatpush1.msra.mxu0 0.0
          %380 = vmatprep.subr.mxu0 0.0
          %381 = vmatpush1.msra.mxu0 0.0
          %382 = vmatprep.subr.mxu0 0.0
          %383 = vmatpush1.msra.mxu0 0.0
          %384 = vmatprep.mubr.f32.mxu0 0.0
          %385 = vmatmul.mubr.f32.gmra.mrb[0].mxu0 %v314
          %v386 = vpop.f32.mrb[0].mxu0
          %v387 = vadd.f32 0.0, %v386
          %v388 = vpop.f32.mrb[0].mxu0
          %389 = vdwg.mxu0
          %vm390 = vcmask 125952
          %391 = vst.msk [vmem:[#allocation2] sm:$0xf] %vm390, %v387
          %v392 = vld [vmem:[%s2] sm:$0x3]
          %v394 = vsel %vm312, %v392, 0
          %v397 = vsel %vm316, %v387, 0
          %399 = vmatprep.subr.mxu0 0.0
          %400 = vmatpush1.msra.mxu0 %v397
          %401 = vmatprep.subr.mxu0 0.0
          %402 = vmatpush1.msra.mxu0 0.0
          %403 = vmatprep.subr.mxu0 0.0
          %404 = vmatpush1.msra.mxu0 0.0
          %405 = vmatprep.subr.mxu0 0.0
          %406 = vmatpush1.msra.mxu0 0.0
          %407 = vmatprep.subr.mxu0 0.0
          %408 = vmatpush1.msra.mxu0 0.0
          %409 = vmatprep.subr.mxu0 0.0
          %410 = vmatpush1.msra.mxu0 0.0
          %411 = vmatprep.subr.mxu0 0.0
          %412 = vmatpush1.msra.mxu0 0.0
          %413 = vmatprep.subr.mxu0 0.0
          %414 = vmatpush1.msra.mxu0 0.0
          %415 = vmatprep.subr.mxu0 0.0
          %416 = vmatpush1.msra.mxu0 0.0
          %417 = vmatprep.subr.mxu0 0.0
          %418 = vmatpush1.msra.mxu0 0.0
          %419 = vmatprep.subr.mxu0 0.0
          %420 = vmatpush1.msra.mxu0 0.0
          %421 = vmatprep.subr.mxu0 0.0
          %422 = vmatpush1.msra.mxu0 0.0
          %423 = vmatprep.subr.mxu0 0.0
          %424 = vmatpush1.msra.mxu0 0.0
          %425 = vmatprep.subr.mxu0 0.0
          %426 = vmatpush1.msra.mxu0 0.0
          %427 = vmatprep.subr.mxu0 0.0
          %428 = vmatpush1.msra.mxu0 0.0
          %429 = vmatprep.subr.mxu0 0.0
          %430 = vmatpush1.msra.mxu0 0.0
          %431 = vmatprep.subr.mxu0 0.0
          %432 = vmatpush1.msra.mxu0 0.0
          %433 = vmatprep.subr.mxu0 0.0
          %434 = vmatpush1.msra.mxu0 0.0
          %435 = vmatprep.subr.mxu0 0.0
          %436 = vmatpush1.msra.mxu0 0.0
          %437 = vmatprep.subr.mxu0 0.0
          %438 = vmatpush1.msra.mxu0 0.0
          %439 = vmatprep.subr.mxu0 0.0
          %440 = vmatpush1.msra.mxu0 0.0
          %441 = vmatprep.subr.mxu0 0.0
          %442 = vmatpush1.msra.mxu0 0.0
          %443 = vmatprep.subr.mxu0 0.0
          %444 = vmatpush1.msra.mxu0 0.0
          %445 = vmatprep.subr.mxu0 0.0
          %446 = vmatpush1.msra.mxu0 0.0
          %447 = vmatprep.subr.mxu0 0.0
          %448 = vmatpush1.msra.mxu0 0.0
          %449 = vmatprep.subr.mxu0 0.0
          %450 = vmatpush1.msra.mxu0 0.0
          %451 = vmatprep.subr.mxu0 0.0
          %452 = vmatpush1.msra.mxu0 0.0
          %453 = vmatprep.subr.mxu0 0.0
          %454 = vmatpush1.msra.mxu0 0.0
          %455 = vmatprep.subr.mxu0 0.0
          %456 = vmatpush1.msra.mxu0 0.0
          %457 = vmatprep.subr.mxu0 0.0
          %458 = vmatpush1.msra.mxu0 0.0
          %459 = vmatprep.subr.mxu0 0.0
          %460 = vmatpush1.msra.mxu0 0.0
          %461 = vmatprep.subr.mxu0 0.0
          %462 = vmatpush1.msra.mxu0 0.0
          %463 = vmatprep.mubr.f32.mxu0 0.0
          %464 = vmatmul.mubr.f32.gmra.mrb[0].mxu0 %v394
          %v465 = vpop.f32.mrb[0].mxu0
          %v466 = vadd.f32 0.0, %v465
          %v467 = vpop.f32.mrb[0].mxu0
          %468 = vdwg.mxu0
          %vm469 = vcmask 123904
          %470 = vst.msk [vmem:[#allocation3] sm:$0x3] %vm469, %v466
        $region44: #{tpu_custom_call.1} parent=39 // pred_fallthru
          _
        %v471 = vld [vmem:[%s294] sm:$0xff]
        %v472 = vld [vmem:[%s294 + $0x8] sm:$0xff]
        %v473 = vld [vmem:[%s304] sm:$0xff]
        %v474 = vld [vmem:[%s304 + $0x8] sm:$0xff]
        %v475 = vlaneseq
        %v476 = vand.u32 %v475, 127
        %v477 = vlaneseq
        %v478 = vshrl.u32 %v477, 7
        %v479 = vsub.s32 0, %v478
        %v480 = vrot.slane %v471, %v479
        %482 = vbcast.lane.b32.xlu0 %v480, 256
        %v483 = vpop.permute.xlu0 %482
        %v484 = vlaneseq
        %v485 = vshrl.u32 %v484, 7
        %v486 = vsub.s32 1, %v485
        %v487 = vrot.slane %v471, %v486
        %489 = vbcast.lane.b32.xlu0 %v487, 256
        %v490 = vpop.permute.xlu0 %489
        %v491 = vlaneseq
        %v492 = vshrl.u32 %v491, 7
        %v493 = vsub.s32 2, %v492
        %v494 = vrot.slane %v471, %v493
        %496 = vbcast.lane.b32.xlu0 %v494, 256
        %v497 = vpop.permute.xlu0 %496
        %v498 = vlaneseq
        %v499 = vshrl.u32 %v498, 7
        %v500 = vsub.s32 3, %v499
        %v501 = vrot.slane %v471, %v500
        %503 = vbcast.lane.b32.xlu0 %v501, 256
        %v504 = vpop.permute.xlu0 %503
        %v505 = vlaneseq
        %v506 = vshrl.u32 %v505, 7
        %v507 = vsub.s32 4, %v506
        %v508 = vrot.slane %v471, %v507
        %510 = vbcast.lane.b32.xlu0 %v508, 256
        %v511 = vpop.permute.xlu0 %510
        %v512 = vlaneseq
        %v513 = vshrl.u32 %v512, 7
        %v514 = vsub.s32 5, %v513
        %v515 = vrot.slane %v471, %v514
        %517 = vbcast.lane.b32.xlu0 %v515, 256
        %v518 = vpop.permute.xlu0 %517
        %v519 = vlaneseq
        %v520 = vshrl.u32 %v519, 7
        %v521 = vsub.s32 6, %v520
        %v522 = vrot.slane %v471, %v521
        %524 = vbcast.lane.b32.xlu0 %v522, 256
        %v525 = vpop.permute.xlu0 %524
        %v526 = vlaneseq
        %v527 = vshrl.u32 %v526, 7
        %v528 = vsub.s32 7, %v527
        %v529 = vrot.slane %v471, %v528
        %531 = vbcast.lane.b32.xlu0 %v529, 256
        %v532 = vpop.permute.xlu0 %531
        %v533 = vlaneseq
        %v534 = vshrl.u32 %v533, 7
        %v535 = vsub.s32 0, %v534
        %v536 = vrot.slane %v472, %v535
        %538 = vbcast.lane.b32.xlu0 %v536, 256
        %v539 = vpop.permute.xlu0 %538
        %v540 = vlaneseq
        %v541 = vshrl.u32 %v540, 7
        %v542 = vsub.s32 1, %v541
        %v543 = vrot.slane %v472, %v542
        %545 = vbcast.lane.b32.xlu0 %v543, 256
        %v546 = vpop.permute.xlu0 %545
        %v547 = vlaneseq
        %v548 = vshrl.u32 %v547, 7
        %v549 = vsub.s32 2, %v548
        %v550 = vrot.slane %v472, %v549
        %552 = vbcast.lane.b32.xlu0 %v550, 256
        %v553 = vpop.permute.xlu0 %552
        %v554 = vlaneseq
        %v555 = vshrl.u32 %v554, 7
        %v556 = vsub.s32 3, %v555
        %v557 = vrot.slane %v472, %v556
        %559 = vbcast.lane.b32.xlu0 %v557, 256
        %v560 = vpop.permute.xlu0 %559
        %v561 = vlaneseq
        %v562 = vshrl.u32 %v561, 7
        %v563 = vsub.s32 4, %v562
        %v564 = vrot.slane %v472, %v563
        %566 = vbcast.lane.b32.xlu0 %v564, 256
        %v567 = vpop.permute.xlu0 %566
        %v568 = vlaneseq
        %v569 = vshrl.u32 %v568, 7
        %v570 = vsub.s32 5, %v569
        %v571 = vrot.slane %v472, %v570
        %573 = vbcast.lane.b32.xlu0 %v571, 256
        %v574 = vpop.permute.xlu0 %573
        %v575 = vlaneseq
        %v576 = vshrl.u32 %v575, 7
        %v577 = vsub.s32 6, %v576
        %v578 = vrot.slane %v472, %v577
        %580 = vbcast.lane.b32.xlu0 %v578, 256
        %v581 = vpop.permute.xlu0 %580
        %v582 = vlaneseq
        %v583 = vshrl.u32 %v582, 7
        %v584 = vsub.s32 7, %v583
        %v585 = vrot.slane %v472, %v584
        %587 = vbcast.lane.b32.xlu0 %v585, 256
        %v588 = vpop.permute.xlu0 %587
        %vm589 = vcmp.eq.s32.totalorder %v483, %v476
        %vm590 = vcmp.eq.s32.totalorder %v490, %v476
        %vm591 = vcmp.eq.s32.totalorder %v497, %v476
        %vm592 = vcmp.eq.s32.totalorder %v504, %v476
        %vm593 = vcmp.eq.s32.totalorder %v511, %v476
        %vm594 = vcmp.eq.s32.totalorder %v518, %v476
        %vm595 = vcmp.eq.s32.totalorder %v525, %v476
        %vm596 = vcmp.eq.s32.totalorder %v532, %v476
        %vm597 = vcmp.eq.s32.totalorder %v539, %v476
        %vm598 = vcmp.eq.s32.totalorder %v546, %v476
        %vm599 = vcmp.eq.s32.totalorder %v553, %v476
        %vm600 = vcmp.eq.s32.totalorder %v560, %v476
        %vm601 = vcmp.eq.s32.totalorder %v567, %v476
        %vm602 = vcmp.eq.s32.totalorder %v574, %v476
        %vm603 = vcmp.eq.s32.totalorder %v581, %v476
        %vm604 = vcmp.eq.s32.totalorder %v588, %v476
        %v605 = vlaneseq
        %v606 = vshrl.u32 %v605, 7
        %v607 = vsub.s32 0, %v606
        %v608 = vrot.slane %v473, %v607
        %610 = vbcast.lane.b32.xlu0 %v608, 256
        %v611 = vpop.permute.xlu0 %610
        %v612 = vlaneseq
        %v613 = vshrl.u32 %v612, 7
        %v614 = vsub.s32 1, %v613
        %v615 = vrot.slane %v473, %v614
        %617 = vbcast.lane.b32.xlu0 %v615, 256
        %v618 = vpop.permute.xlu0 %617
        %v619 = vlaneseq
        %v620 = vshrl.u32 %v619, 7
        %v621 = vsub.s32 2, %v620
        %v622 = vrot.slane %v473, %v621
        %624 = vbcast.lane.b32.xlu0 %v622, 256
        %v625 = vpop.permute.xlu0 %624
        %v626 = vlaneseq
        %v627 = vshrl.u32 %v626, 7
        %v628 = vsub.s32 3, %v627
        %v629 = vrot.slane %v473, %v628
        %631 = vbcast.lane.b32.xlu0 %v629, 256
        %v632 = vpop.permute.xlu0 %631
        %v633 = vlaneseq
        %v634 = vshrl.u32 %v633, 7
        %v635 = vsub.s32 4, %v634
        %v636 = vrot.slane %v473, %v635
        %638 = vbcast.lane.b32.xlu0 %v636, 256
        %v639 = vpop.permute.xlu0 %638
        %v640 = vlaneseq
        %v641 = vshrl.u32 %v640, 7
        %v642 = vsub.s32 5, %v641
        %v643 = vrot.slane %v473, %v642
        %645 = vbcast.lane.b32.xlu0 %v643, 256
        %v646 = vpop.permute.xlu0 %645
        %v647 = vlaneseq
        %v648 = vshrl.u32 %v647, 7
        %v649 = vsub.s32 6, %v648
        %v650 = vrot.slane %v473, %v649
        %652 = vbcast.lane.b32.xlu0 %v650, 256
        %v653 = vpop.permute.xlu0 %652
        %v654 = vlaneseq
        %v655 = vshrl.u32 %v654, 7
        %v656 = vsub.s32 7, %v655
        %v657 = vrot.slane %v473, %v656
        %659 = vbcast.lane.b32.xlu0 %v657, 256
        %v660 = vpop.permute.xlu0 %659
        %v661 = vlaneseq
        %v662 = vshrl.u32 %v661, 7
        %v663 = vsub.s32 0, %v662
        %v664 = vrot.slane %v474, %v663
        %666 = vbcast.lane.b32.xlu0 %v664, 256
        %v667 = vpop.permute.xlu0 %666
        %v668 = vlaneseq
        %v669 = vshrl.u32 %v668, 7
        %v670 = vsub.s32 1, %v669
        %v671 = vrot.slane %v474, %v670
        %673 = vbcast.lane.b32.xlu0 %v671, 256
        %v674 = vpop.permute.xlu0 %673
        %v675 = vlaneseq
        %v676 = vshrl.u32 %v675, 7
        %v677 = vsub.s32 2, %v676
        %v678 = vrot.slane %v474, %v677
        %680 = vbcast.lane.b32.xlu0 %v678, 256
        %v681 = vpop.permute.xlu0 %680
        %v682 = vlaneseq
        %v683 = vshrl.u32 %v682, 7
        %v684 = vsub.s32 3, %v683
        %v685 = vrot.slane %v474, %v684
        %687 = vbcast.lane.b32.xlu0 %v685, 256
        %v688 = vpop.permute.xlu0 %687
        %v689 = vlaneseq
        %v690 = vshrl.u32 %v689, 7
        %v691 = vsub.s32 4, %v690
        %v692 = vrot.slane %v474, %v691
        %694 = vbcast.lane.b32.xlu0 %v692, 256
        %v695 = vpop.permute.xlu0 %694
        %v696 = vlaneseq
        %v697 = vshrl.u32 %v696, 7
        %v698 = vsub.s32 5, %v697
        %v699 = vrot.slane %v474, %v698
        %701 = vbcast.lane.b32.xlu0 %v699, 256
        %v702 = vpop.permute.xlu0 %701
        %v703 = vlaneseq
        %v704 = vshrl.u32 %v703, 7
        %v705 = vsub.s32 6, %v704
        %v706 = vrot.slane %v474, %v705
        %708 = vbcast.lane.b32.xlu0 %v706, 256
        %v709 = vpop.permute.xlu0 %708
        %v710 = vlaneseq
        %v711 = vshrl.u32 %v710, 7
        %v712 = vsub.s32 7, %v711
        %v713 = vrot.slane %v474, %v712
        %715 = vbcast.lane.b32.xlu0 %v713, 256
        %v716 = vpop.permute.xlu0 %715
        %vm717 = vcmp.eq.s32.totalorder %v611, %v476
        %vm718 = vcmp.eq.s32.totalorder %v618, %v476
        %vm719 = vcmp.eq.s32.totalorder %v625, %v476
        %vm720 = vcmp.eq.s32.totalorder %v632, %v476
        %vm721 = vcmp.eq.s32.totalorder %v639, %v476
        %vm722 = vcmp.eq.s32.totalorder %v646, %v476
        %vm723 = vcmp.eq.s32.totalorder %v653, %v476
        %vm724 = vcmp.eq.s32.totalorder %v660, %v476
        %vm725 = vcmp.eq.s32.totalorder %v667, %v476
        %vm726 = vcmp.eq.s32.totalorder %v674, %v476
        %vm727 = vcmp.eq.s32.totalorder %v681, %v476
        %vm728 = vcmp.eq.s32.totalorder %v688, %v476
        %vm729 = vcmp.eq.s32.totalorder %v695, %v476
        %vm730 = vcmp.eq.s32.totalorder %v702, %v476
        %vm731 = vcmp.eq.s32.totalorder %v709, %v476
        %vm732 = vcmp.eq.s32.totalorder %v716, %v476
        %v733 = vld [vmem:[#allocation3] sm:$0x3]
        %v734 = vlaneseq
        %v735 = vshrl.u32 %v734, 7
        %v736 = vsub.s32 0, %v735
        %v737 = vrot.slane %v733, %v736
        %v738 = vsel %vm589, %v737, 0.0
        %v739 = vsel %vm590, %v737, 0.0
        %v740 = vsel %vm591, %v737, 0.0
        %v741 = vsel %vm592, %v737, 0.0
        %v742 = vsel %vm593, %v737, 0.0
        %v743 = vsel %vm594, %v737, 0.0
        %v744 = vsel %vm595, %v737, 0.0
        %v745 = vsel %vm596, %v737, 0.0
        %v746 = vsel %vm597, %v737, 0.0
        %v747 = vsel %vm598, %v737, 0.0
        %v748 = vsel %vm599, %v737, 0.0
        %v749 = vsel %vm600, %v737, 0.0
        %v750 = vsel %vm601, %v737, 0.0
        %v751 = vsel %vm602, %v737, 0.0
        %v752 = vsel %vm603, %v737, 0.0
        %v753 = vsel %vm604, %v737, 0.0
        %v754 = vlaneseq
        %v755 = vshrl.u32 %v754, 7
        %v756 = vsub.s32 1, %v755
        %v757 = vrot.slane %v733, %v756
        %v758 = vsel %vm717, %v757, 0.0
        %v759 = vsel %vm718, %v757, 0.0
        %v760 = vsel %vm719, %v757, 0.0
        %v761 = vsel %vm720, %v757, 0.0
        %v762 = vsel %vm721, %v757, 0.0
        %v763 = vsel %vm722, %v757, 0.0
        %v764 = vsel %vm723, %v757, 0.0
        %v765 = vsel %vm724, %v757, 0.0
        %v766 = vsel %vm725, %v757, 0.0
        %v767 = vsel %vm726, %v757, 0.0
        %v768 = vsel %vm727, %v757, 0.0
        %v769 = vsel %vm728, %v757, 0.0
        %v770 = vsel %vm729, %v757, 0.0
        %v771 = vsel %vm730, %v757, 0.0
        %v772 = vsel %vm731, %v757, 0.0
        %v773 = vsel %vm732, %v757, 0.0
        %v774 = vadd.f32 %v738, %v758
        %v775 = vadd.f32 %v739, %v759
        %v776 = vadd.f32 %v740, %v760
        %v777 = vadd.f32 %v741, %v761
        %v778 = vadd.f32 %v742, %v762
        %v779 = vadd.f32 %v743, %v763
        %v780 = vadd.f32 %v744, %v764
        %v781 = vadd.f32 %v745, %v765
        %v782 = vadd.f32 %v746, %v766
        %v783 = vadd.f32 %v747, %v767
        %v784 = vadd.f32 %v748, %v768
        %v785 = vadd.f32 %v749, %v769
        %v786 = vadd.f32 %v750, %v770
        %v787 = vadd.f32 %v751, %v771
        %v788 = vadd.f32 %v752, %v772
        %v789 = vadd.f32 %v753, %v773
        %vm790 = vcmask 130048
        %v791 = vsel %vm790, %v774, 0.0
        %792 = vadd.xlane.f32.xlu0 %v791
        %v793 = vpop.xlane.xlu0 %792
        %v794 = vsel %vm790, %v775, 0.0
        %795 = vadd.xlane.f32.xlu0 %v794
        %v796 = vpop.xlane.xlu0 %795
        %v797 = vsel %vm790, %v776, 0.0
        %798 = vadd.xlane.f32.xlu0 %v797
        %v799 = vpop.xlane.xlu0 %798
        %v800 = vsel %vm790, %v777, 0.0
        %801 = vadd.xlane.f32.xlu0 %v800
        %v802 = vpop.xlane.xlu0 %801
        %v803 = vsel %vm790, %v778, 0.0
        %804 = vadd.xlane.f32.xlu0 %v803
        %v805 = vpop.xlane.xlu0 %804
        %v806 = vsel %vm790, %v779, 0.0
        %807 = vadd.xlane.f32.xlu0 %v806
        %v808 = vpop.xlane.xlu0 %807
        %v809 = vsel %vm790, %v780, 0.0
        %810 = vadd.xlane.f32.xlu0 %v809
        %v811 = vpop.xlane.xlu0 %810
        %v812 = vsel %vm790, %v781, 0.0
        %813 = vadd.xlane.f32.xlu0 %v812
        %v814 = vpop.xlane.xlu0 %813
        %v815 = vsel %vm790, %v782, 0.0
        %816 = vadd.xlane.f32.xlu0 %v815
        %v817 = vpop.xlane.xlu0 %816
        %v818 = vsel %vm790, %v783, 0.0
        %819 = vadd.xlane.f32.xlu0 %v818
        %v820 = vpop.xlane.xlu0 %819
        %v821 = vsel %vm790, %v784, 0.0
        %822 = vadd.xlane.f32.xlu0 %v821
        %v823 = vpop.xlane.xlu0 %822
        %v824 = vsel %vm790, %v785, 0.0
        %825 = vadd.xlane.f32.xlu0 %v824
        %v826 = vpop.xlane.xlu0 %825
        %v827 = vsel %vm790, %v786, 0.0
        %828 = vadd.xlane.f32.xlu0 %v827
        %v829 = vpop.xlane.xlu0 %828
        %v830 = vsel %vm790, %v787, 0.0
        %831 = vadd.xlane.f32.xlu0 %v830
        %v832 = vpop.xlane.xlu0 %831
        %v833 = vsel %vm790, %v788, 0.0
        %834 = vadd.xlane.f32.xlu0 %v833
        %v835 = vpop.xlane.xlu0 %834
        %v836 = vsel %vm790, %v789, 0.0
        %837 = vadd.xlane.f32.xlu0 %v836
        %v838 = vpop.xlane.xlu0 %837
        %vm839 = vcmp.gt.f32.partialorder %v793, 0.0
        %vm840 = vcmp.gt.f32.partialorder %v796, 0.0
        %vm841 = vcmp.gt.f32.partialorder %v799, 0.0
        %vm842 = vcmp.gt.f32.partialorder %v802, 0.0
        %vm843 = vcmp.gt.f32.partialorder %v805, 0.0
        %vm844 = vcmp.gt.f32.partialorder %v808, 0.0
        %vm845 = vcmp.gt.f32.partialorder %v811, 0.0
        %vm846 = vcmp.gt.f32.partialorder %v814, 0.0
        %vm847 = vcmp.gt.f32.partialorder %v817, 0.0
        %vm848 = vcmp.gt.f32.partialorder %v820, 0.0
        %vm849 = vcmp.gt.f32.partialorder %v823, 0.0
        %vm850 = vcmp.gt.f32.partialorder %v826, 0.0
        %vm851 = vcmp.gt.f32.partialorder %v829, 0.0
        %vm852 = vcmp.gt.f32.partialorder %v832, 0.0
        %vm853 = vcmp.gt.f32.partialorder %v835, 0.0
        %vm854 = vcmp.gt.f32.partialorder %v838, 0.0
        %v855 = vmul.f32 %v793, 0.2
        %v856 = vmul.f32 %v796, 0.2
        %v857 = vmul.f32 %v799, 0.2
        %v858 = vmul.f32 %v802, 0.2
        %v859 = vmul.f32 %v805, 0.2
        %v860 = vmul.f32 %v808, 0.2
        %v861 = vmul.f32 %v811, 0.2
        %v862 = vmul.f32 %v814, 0.2
        %v863 = vmul.f32 %v817, 0.2
        %v864 = vmul.f32 %v820, 0.2
        %v865 = vmul.f32 %v823, 0.2
        %v866 = vmul.f32 %v826, 0.2
        %v867 = vmul.f32 %v829, 0.2
        %v868 = vmul.f32 %v832, 0.2
        %v869 = vmul.f32 %v835, 0.2
        %v870 = vmul.f32 %v838, 0.2
        %v871 = vsel %vm839, %v793, %v855
        %v872 = vsel %vm840, %v796, %v856
        %v873 = vsel %vm841, %v799, %v857
        %v874 = vsel %vm842, %v802, %v858
        %v875 = vsel %vm843, %v805, %v859
        %v876 = vsel %vm844, %v808, %v860
        %v877 = vsel %vm845, %v811, %v861
        %v878 = vsel %vm846, %v814, %v862
        %v879 = vsel %vm847, %v817, %v863
        %v880 = vsel %vm848, %v820, %v864
        %v881 = vsel %vm849, %v823, %v865
        %v882 = vsel %vm850, %v826, %v866
        %v883 = vsel %vm851, %v829, %v867
        %v884 = vsel %vm852, %v832, %v868
        %v885 = vsel %vm853, %v835, %v869
        %v886 = vsel %vm854, %v838, %v870
        %v903 = vlaneseq
        %v904 = vshrl.u32 %v903, 7
        %v905 = vsub.s32 %v476, %v904
        %v906 = vrot.slane %v871, %v905
        %v907 = vlaneseq
        %v908 = vshrl.u32 %v907, 7
        %v909 = vsub.s32 %v476, %v908
        %v910 = vrot.slane %v872, %v909
        %v911 = vlaneseq
        %v912 = vshrl.u32 %v911, 7
        %v913 = vsub.s32 %v476, %v912
        %v914 = vrot.slane %v873, %v913
        %v915 = vlaneseq
        %v916 = vshrl.u32 %v915, 7
        %v917 = vsub.s32 %v476, %v916
        %v918 = vrot.slane %v874, %v917
        %v919 = vlaneseq
        %v920 = vshrl.u32 %v919, 7
        %v921 = vsub.s32 %v476, %v920
        %v922 = vrot.slane %v875, %v921
        %v923 = vlaneseq
        %v924 = vshrl.u32 %v923, 7
        %v925 = vsub.s32 %v476, %v924
        %v926 = vrot.slane %v876, %v925
        %v927 = vlaneseq
        %v928 = vshrl.u32 %v927, 7
        %v929 = vsub.s32 %v476, %v928
        %v930 = vrot.slane %v877, %v929
        %v931 = vlaneseq
        %v932 = vshrl.u32 %v931, 7
        %v933 = vsub.s32 %v476, %v932
        %v934 = vrot.slane %v878, %v933
        %v935 = vlaneseq
        %v936 = vshrl.u32 %v935, 7
        %v937 = vsub.s32 %v476, %v936
        %v938 = vrot.slane %v879, %v937
        %v939 = vlaneseq
        %v940 = vshrl.u32 %v939, 7
        %v941 = vsub.s32 %v476, %v940
        %v942 = vrot.slane %v880, %v941
        %v943 = vlaneseq
        %v944 = vshrl.u32 %v943, 7
        %v945 = vsub.s32 %v476, %v944
        %v946 = vrot.slane %v881, %v945
        %v947 = vlaneseq
        %v948 = vshrl.u32 %v947, 7
        %v949 = vsub.s32 %v476, %v948
        %v950 = vrot.slane %v882, %v949
        %v951 = vlaneseq
        %v952 = vshrl.u32 %v951, 7
        %v953 = vsub.s32 %v476, %v952
        %v954 = vrot.slane %v883, %v953
        %v955 = vlaneseq
        %v956 = vshrl.u32 %v955, 7
        %v957 = vsub.s32 %v476, %v956
        %v958 = vrot.slane %v884, %v957
        %v959 = vlaneseq
        %v960 = vshrl.u32 %v959, 7
        %v961 = vsub.s32 %v476, %v960
        %v962 = vrot.slane %v885, %v961
        %v963 = vlaneseq
        %v964 = vshrl.u32 %v963, 7
        %v965 = vsub.s32 %v476, %v964
        %v966 = vrot.slane %v886, %v965
        %vm967 = vcmask 1041409
        %v968 = vsel %vm967, %v910, %v906
        %vm969 = vcmask 1042434
        %v970 = vsel %vm969, %v914, %v968
        %vm971 = vcmask 1043459
        %v972 = vsel %vm971, %v918, %v970
        %vm973 = vcmask 1044484
        %v974 = vsel %vm973, %v922, %v972
        %vm975 = vcmask 1045509
        %v976 = vsel %vm975, %v926, %v974
        %vm977 = vcmask 1046534
        %v978 = vsel %vm977, %v930, %v976
        %vm979 = vcmask 1047559
        %v980 = vsel %vm979, %v934, %v978
        %v981 = vsel %vm967, %v942, %v938
        %v982 = vsel %vm969, %v946, %v981
        %v983 = vsel %vm971, %v950, %v982
        %v984 = vsel %vm973, %v954, %v983
        %v985 = vsel %vm975, %v958, %v984
        %v986 = vsel %vm977, %v962, %v985
        %v987 = vsel %vm979, %v966, %v986
        %vm990 = vcmask 64512
        %v991 = vsel %vm990, %v980, -inf
        %992 = vmax.xlane.f32.xlu0 %v991
        %v993 = vpop.xlane.xlu0 %992
        %v994 = vsel %vm990, %v987, -inf
        %995 = vmax.xlane.f32.xlu0 %v994
        %v996 = vpop.xlane.xlu0 %995
        %v999 = vlaneseq
        %v1000 = vshrl.u32 %v999, 7
        %v1001 = vsub.s32 0, %v1000
        %v1002 = vrot.slane %v993, %v1001
        %v1003 = vlaneseq
        %v1004 = vshrl.u32 %v1003, 7
        %v1005 = vsub.s32 1, %v1004
        %v1006 = vrot.slane %v993, %v1005
        %v1007 = vlaneseq
        %v1008 = vshrl.u32 %v1007, 7
        %v1009 = vsub.s32 2, %v1008
        %v1010 = vrot.slane %v993, %v1009
        %v1011 = vlaneseq
        %v1012 = vshrl.u32 %v1011, 7
        %v1013 = vsub.s32 3, %v1012
        %v1014 = vrot.slane %v993, %v1013
        %v1015 = vlaneseq
        %v1016 = vshrl.u32 %v1015, 7
        %v1017 = vsub.s32 4, %v1016
        %v1018 = vrot.slane %v993, %v1017
        %v1019 = vlaneseq
        %v1020 = vshrl.u32 %v1019, 7
        %v1021 = vsub.s32 5, %v1020
        %v1022 = vrot.slane %v993, %v1021
        %v1023 = vlaneseq
        %v1024 = vshrl.u32 %v1023, 7
        %v1025 = vsub.s32 6, %v1024
        %v1026 = vrot.slane %v993, %v1025
        %v1027 = vlaneseq
        %v1028 = vshrl.u32 %v1027, 7
        %v1029 = vsub.s32 7, %v1028
        %v1030 = vrot.slane %v993, %v1029
        %v1031 = vlaneseq
        %v1032 = vshrl.u32 %v1031, 7
        %v1033 = vsub.s32 0, %v1032
        %v1034 = vrot.slane %v996, %v1033
        %v1035 = vlaneseq
        %v1036 = vshrl.u32 %v1035, 7
        %v1037 = vsub.s32 1, %v1036
        %v1038 = vrot.slane %v996, %v1037
        %v1039 = vlaneseq
        %v1040 = vshrl.u32 %v1039, 7
        %v1041 = vsub.s32 2, %v1040
        %v1042 = vrot.slane %v996, %v1041
        %v1043 = vlaneseq
        %v1044 = vshrl.u32 %v1043, 7
        %v1045 = vsub.s32 3, %v1044
        %v1046 = vrot.slane %v996, %v1045
        %v1047 = vlaneseq
        %v1048 = vshrl.u32 %v1047, 7
        %v1049 = vsub.s32 4, %v1048
        %v1050 = vrot.slane %v996, %v1049
        %v1051 = vlaneseq
        %v1052 = vshrl.u32 %v1051, 7
        %v1053 = vsub.s32 5, %v1052
        %v1054 = vrot.slane %v996, %v1053
        %v1055 = vlaneseq
        %v1056 = vshrl.u32 %v1055, 7
        %v1057 = vsub.s32 6, %v1056
        %v1058 = vrot.slane %v996, %v1057
        %v1059 = vlaneseq
        %v1060 = vshrl.u32 %v1059, 7
        %v1061 = vsub.s32 7, %v1060
        %v1062 = vrot.slane %v996, %v1061
        %v1079 = vsub.f32 %v871, %v1002
        %v1080 = vsub.f32 %v872, %v1006
        %v1081 = vsub.f32 %v873, %v1010
        %v1082 = vsub.f32 %v874, %v1014
        %v1083 = vsub.f32 %v875, %v1018
        %v1084 = vsub.f32 %v876, %v1022
        %v1085 = vsub.f32 %v877, %v1026
        %v1086 = vsub.f32 %v878, %v1030
        %v1087 = vsub.f32 %v879, %v1034
        %v1088 = vsub.f32 %v880, %v1038
        %v1089 = vsub.f32 %v881, %v1042
        %v1090 = vsub.f32 %v882, %v1046
        %v1091 = vsub.f32 %v883, %v1050
        %v1092 = vsub.f32 %v884, %v1054
        %v1093 = vsub.f32 %v885, %v1058
        %v1094 = vsub.f32 %v886, %v1062
        %v1095 = vmul.f32 %v1079, 1.442695
        %v1096 = vpow.pop %v1095
        %v1097 = vmul.f32 %v1080, 1.442695
        %v1098 = vpow.pop %v1097
        %v1099 = vmul.f32 %v1081, 1.442695
        %v1100 = vpow.pop %v1099
        %v1101 = vmul.f32 %v1082, 1.442695
        %v1102 = vpow.pop %v1101
        %v1103 = vmul.f32 %v1083, 1.442695
        %v1104 = vpow.pop %v1103
        %v1105 = vmul.f32 %v1084, 1.442695
        %v1106 = vpow.pop %v1105
        %v1107 = vmul.f32 %v1085, 1.442695
        %v1108 = vpow.pop %v1107
        %v1109 = vmul.f32 %v1086, 1.442695
        %v1110 = vpow.pop %v1109
        %v1111 = vmul.f32 %v1087, 1.442695
        %v1112 = vpow.pop %v1111
        %v1113 = vmul.f32 %v1088, 1.442695
        %v1114 = vpow.pop %v1113
        %v1115 = vmul.f32 %v1089, 1.442695
        %v1116 = vpow.pop %v1115
        %v1117 = vmul.f32 %v1090, 1.442695
        %v1118 = vpow.pop %v1117
        %v1119 = vmul.f32 %v1091, 1.442695
        %v1120 = vpow.pop %v1119
        %v1121 = vmul.f32 %v1092, 1.442695
        %v1122 = vpow.pop %v1121
        %v1123 = vmul.f32 %v1093, 1.442695
        %v1124 = vpow.pop %v1123
        %v1125 = vmul.f32 %v1094, 1.442695
        %v1126 = vpow.pop %v1125
        %1143 = vset.pattern.permute.xlu0 0
        %1144 = vperm.xlu0 %1143, %v1096
        %v1145 = vpop.permute.xlu0 %1144
        %1146 = vset.pattern.permute.xlu0 0
        %1147 = vperm.xlu0 %1146, %v1098
        %v1148 = vpop.permute.xlu0 %1147
        %1149 = vset.pattern.permute.xlu0 0
        %1150 = vperm.xlu0 %1149, %v1100
        %v1151 = vpop.permute.xlu0 %1150
        %1152 = vset.pattern.permute.xlu0 0
        %1153 = vperm.xlu0 %1152, %v1102
        %v1154 = vpop.permute.xlu0 %1153
        %1155 = vset.pattern.permute.xlu0 0
        %1156 = vperm.xlu0 %1155, %v1104
        %v1157 = vpop.permute.xlu0 %1156
        %1158 = vset.pattern.permute.xlu0 0
        %1159 = vperm.xlu0 %1158, %v1106
        %v1160 = vpop.permute.xlu0 %1159
        %1161 = vset.pattern.permute.xlu0 0
        %1162 = vperm.xlu0 %1161, %v1108
        %v1163 = vpop.permute.xlu0 %1162
        %1164 = vset.pattern.permute.xlu0 0
        %1165 = vperm.xlu0 %1164, %v1110
        %v1166 = vpop.permute.xlu0 %1165
        %1167 = vset.pattern.permute.xlu0 0
        %1168 = vperm.xlu0 %1167, %v1112
        %v1169 = vpop.permute.xlu0 %1168
        %1170 = vset.pattern.permute.xlu0 0
        %1171 = vperm.xlu0 %1170, %v1114
        %v1172 = vpop.permute.xlu0 %1171
        %1173 = vset.pattern.permute.xlu0 0
        %1174 = vperm.xlu0 %1173, %v1116
        %v1175 = vpop.permute.xlu0 %1174
        %1176 = vset.pattern.permute.xlu0 0
        %1177 = vperm.xlu0 %1176, %v1118
        %v1178 = vpop.permute.xlu0 %1177
        %1179 = vset.pattern.permute.xlu0 0
        %1180 = vperm.xlu0 %1179, %v1120
        %v1181 = vpop.permute.xlu0 %1180
        %1182 = vset.pattern.permute.xlu0 0
        %1183 = vperm.xlu0 %1182, %v1122
        %v1184 = vpop.permute.xlu0 %1183
        %1185 = vset.pattern.permute.xlu0 0
        %1186 = vperm.xlu0 %1185, %v1124
        %v1187 = vpop.permute.xlu0 %1186
        %1188 = vset.pattern.permute.xlu0 0
        %1189 = vperm.xlu0 %1188, %v1126
        %v1190 = vpop.permute.xlu0 %1189
        %v1191 = vlaneseq
        %v1192 = vshrl.u32 %v1191, 7
        %v1193 = vsub.s32 %v476, %v1192
        %v1194 = vrot.slane %v1145, %v1193
        %v1195 = vlaneseq
        %v1196 = vshrl.u32 %v1195, 7
        %v1197 = vsub.s32 %v476, %v1196
        %v1198 = vrot.slane %v1148, %v1197
        %v1199 = vlaneseq
        %v1200 = vshrl.u32 %v1199, 7
        %v1201 = vsub.s32 %v476, %v1200
        %v1202 = vrot.slane %v1151, %v1201
        %v1203 = vlaneseq
        %v1204 = vshrl.u32 %v1203, 7
        %v1205 = vsub.s32 %v476, %v1204
        %v1206 = vrot.slane %v1154, %v1205
        %v1207 = vlaneseq
        %v1208 = vshrl.u32 %v1207, 7
        %v1209 = vsub.s32 %v476, %v1208
        %v1210 = vrot.slane %v1157, %v1209
        %v1211 = vlaneseq
        %v1212 = vshrl.u32 %v1211, 7
        %v1213 = vsub.s32 %v476, %v1212
        %v1214 = vrot.slane %v1160, %v1213
        %v1215 = vlaneseq
        %v1216 = vshrl.u32 %v1215, 7
        %v1217 = vsub.s32 %v476, %v1216
        %v1218 = vrot.slane %v1163, %v1217
        %v1219 = vlaneseq
        %v1220 = vshrl.u32 %v1219, 7
        %v1221 = vsub.s32 %v476, %v1220
        %v1222 = vrot.slane %v1166, %v1221
        %v1223 = vlaneseq
        %v1224 = vshrl.u32 %v1223, 7
        %v1225 = vsub.s32 %v476, %v1224
        %v1226 = vrot.slane %v1169, %v1225
        %v1227 = vlaneseq
        %v1228 = vshrl.u32 %v1227, 7
        %v1229 = vsub.s32 %v476, %v1228
        %v1230 = vrot.slane %v1172, %v1229
        %v1231 = vlaneseq
        %v1232 = vshrl.u32 %v1231, 7
        %v1233 = vsub.s32 %v476, %v1232
        %v1234 = vrot.slane %v1175, %v1233
        %v1235 = vlaneseq
        %v1236 = vshrl.u32 %v1235, 7
        %v1237 = vsub.s32 %v476, %v1236
        %v1238 = vrot.slane %v1178, %v1237
        %v1239 = vlaneseq
        %v1240 = vshrl.u32 %v1239, 7
        %v1241 = vsub.s32 %v476, %v1240
        %v1242 = vrot.slane %v1181, %v1241
        %v1243 = vlaneseq
        %v1244 = vshrl.u32 %v1243, 7
        %v1245 = vsub.s32 %v476, %v1244
        %v1246 = vrot.slane %v1184, %v1245
        %v1247 = vlaneseq
        %v1248 = vshrl.u32 %v1247, 7
        %v1249 = vsub.s32 %v476, %v1248
        %v1250 = vrot.slane %v1187, %v1249
        %v1251 = vlaneseq
        %v1252 = vshrl.u32 %v1251, 7
        %v1253 = vsub.s32 %v476, %v1252
        %v1254 = vrot.slane %v1190, %v1253
        %v1255 = vsel %vm967, %v1198, %v1194
        %v1256 = vsel %vm969, %v1202, %v1255
        %v1257 = vsel %vm971, %v1206, %v1256
        %v1258 = vsel %vm973, %v1210, %v1257
        %v1259 = vsel %vm975, %v1214, %v1258
        %v1260 = vsel %vm977, %v1218, %v1259
        %v1261 = vsel %vm979, %v1222, %v1260
        %v1262 = vsel %vm967, %v1230, %v1226
        %v1263 = vsel %vm969, %v1234, %v1262
        %v1264 = vsel %vm971, %v1238, %v1263
        %v1265 = vsel %vm973, %v1242, %v1264
        %v1266 = vsel %vm975, %v1246, %v1265
        %v1267 = vsel %vm977, %v1250, %v1266
        %v1268 = vsel %vm979, %v1254, %v1267
        %v1271 = vsel %vm990, %v1261, 0.0
        %1272 = vadd.xlane.f32.xlu0 %v1271
        %v1273 = vpop.xlane.xlu0 %1272
        %v1274 = vsel %vm990, %v1268, 0.0
        %1275 = vadd.xlane.f32.xlu0 %v1274
        %v1276 = vpop.xlane.xlu0 %1275
        %v1277 = vrcp.pop %v1273
        %v1278 = vrcp.pop %v1276
        %v1281 = vlaneseq
        %v1282 = vshrl.u32 %v1281, 7
        %v1283 = vsub.s32 0, %v1282
        %v1284 = vrot.slane %v1277, %v1283
        %v1285 = vlaneseq
        %v1286 = vshrl.u32 %v1285, 7
        %v1287 = vsub.s32 1, %v1286
        %v1288 = vrot.slane %v1277, %v1287
        %v1289 = vlaneseq
        %v1290 = vshrl.u32 %v1289, 7
        %v1291 = vsub.s32 2, %v1290
        %v1292 = vrot.slane %v1277, %v1291
        %v1293 = vlaneseq
        %v1294 = vshrl.u32 %v1293, 7
        %v1295 = vsub.s32 3, %v1294
        %v1296 = vrot.slane %v1277, %v1295
        %v1297 = vlaneseq
        %v1298 = vshrl.u32 %v1297, 7
        %v1299 = vsub.s32 4, %v1298
        %v1300 = vrot.slane %v1277, %v1299
        %v1301 = vlaneseq
        %v1302 = vshrl.u32 %v1301, 7
        %v1303 = vsub.s32 5, %v1302
        %v1304 = vrot.slane %v1277, %v1303
        %v1305 = vlaneseq
        %v1306 = vshrl.u32 %v1305, 7
        %v1307 = vsub.s32 6, %v1306
        %v1308 = vrot.slane %v1277, %v1307
        %v1309 = vlaneseq
        %v1310 = vshrl.u32 %v1309, 7
        %v1311 = vsub.s32 7, %v1310
        %v1312 = vrot.slane %v1277, %v1311
        %v1313 = vlaneseq
        %v1314 = vshrl.u32 %v1313, 7
        %v1315 = vsub.s32 0, %v1314
        %v1316 = vrot.slane %v1278, %v1315
        %v1317 = vlaneseq
        %v1318 = vshrl.u32 %v1317, 7
        %v1319 = vsub.s32 1, %v1318
        %v1320 = vrot.slane %v1278, %v1319
        %v1321 = vlaneseq
        %v1322 = vshrl.u32 %v1321, 7
        %v1323 = vsub.s32 2, %v1322
        %v1324 = vrot.slane %v1278, %v1323
        %v1325 = vlaneseq
        %v1326 = vshrl.u32 %v1325, 7
        %v1327 = vsub.s32 3, %v1326
        %v1328 = vrot.slane %v1278, %v1327
        %v1329 = vlaneseq
        %v1330 = vshrl.u32 %v1329, 7
        %v1331 = vsub.s32 4, %v1330
        %v1332 = vrot.slane %v1278, %v1331
        %v1333 = vlaneseq
        %v1334 = vshrl.u32 %v1333, 7
        %v1335 = vsub.s32 5, %v1334
        %v1336 = vrot.slane %v1278, %v1335
        %v1337 = vlaneseq
        %v1338 = vshrl.u32 %v1337, 7
        %v1339 = vsub.s32 6, %v1338
        %v1340 = vrot.slane %v1278, %v1339
        %v1341 = vlaneseq
        %v1342 = vshrl.u32 %v1341, 7
        %v1343 = vsub.s32 7, %v1342
        %v1344 = vrot.slane %v1278, %v1343
        %v1361 = vmul.f32 %v1096, %v1284
        %v1362 = vmul.f32 %v1098, %v1288
        %v1363 = vmul.f32 %v1100, %v1292
        %v1364 = vmul.f32 %v1102, %v1296
        %v1365 = vmul.f32 %v1104, %v1300
        %v1366 = vmul.f32 %v1106, %v1304
        %v1367 = vmul.f32 %v1108, %v1308
        %v1368 = vmul.f32 %v1110, %v1312
        %v1369 = vmul.f32 %v1112, %v1316
        %v1370 = vmul.f32 %v1114, %v1320
        %v1371 = vmul.f32 %v1116, %v1324
        %v1372 = vmul.f32 %v1118, %v1328
        %v1373 = vmul.f32 %v1120, %v1332
        %v1374 = vmul.f32 %v1122, %v1336
        %v1375 = vmul.f32 %v1124, %v1340
        %v1376 = vmul.f32 %v1126, %v1344
        %1378 = vset.pattern.permute.xlu0 0
        %1379 = vperm.xlu0 %1378, %v1361
        %v1380 = vpop.permute.xlu0 %1379
        %1383 = vset.pattern.permute.xlu0 0
        %1384 = vperm.xlu0 %1383, %v1362
        %v1385 = vpop.permute.xlu0 %1384
        %1388 = vset.pattern.permute.xlu0 0
        %1389 = vperm.xlu0 %1388, %v1363
        %v1390 = vpop.permute.xlu0 %1389
        %1393 = vset.pattern.permute.xlu0 0
        %1394 = vperm.xlu0 %1393, %v1364
        %v1395 = vpop.permute.xlu0 %1394
        %1398 = vset.pattern.permute.xlu0 0
        %1399 = vperm.xlu0 %1398, %v1365
        %v1400 = vpop.permute.xlu0 %1399
        %1403 = vset.pattern.permute.xlu0 0
        %1404 = vperm.xlu0 %1403, %v1366
        %v1405 = vpop.permute.xlu0 %1404
        %1408 = vset.pattern.permute.xlu0 0
        %1409 = vperm.xlu0 %1408, %v1367
        %v1410 = vpop.permute.xlu0 %1409
        %1413 = vset.pattern.permute.xlu0 0
        %1414 = vperm.xlu0 %1413, %v1368
        %v1415 = vpop.permute.xlu0 %1414
        %1418 = vset.pattern.permute.xlu0 0
        %1419 = vperm.xlu0 %1418, %v1369
        %v1420 = vpop.permute.xlu0 %1419
        %1423 = vset.pattern.permute.xlu0 0
        %1424 = vperm.xlu0 %1423, %v1370
        %v1425 = vpop.permute.xlu0 %1424
        %1428 = vset.pattern.permute.xlu0 0
        %1429 = vperm.xlu0 %1428, %v1371
        %v1430 = vpop.permute.xlu0 %1429
        %1433 = vset.pattern.permute.xlu0 0
        %1434 = vperm.xlu0 %1433, %v1372
        %v1435 = vpop.permute.xlu0 %1434
        %1438 = vset.pattern.permute.xlu0 0
        %1439 = vperm.xlu0 %1438, %v1373
        %v1440 = vpop.permute.xlu0 %1439
        %1443 = vset.pattern.permute.xlu0 0
        %1444 = vperm.xlu0 %1443, %v1374
        %v1445 = vpop.permute.xlu0 %1444
        %1448 = vset.pattern.permute.xlu0 0
        %1449 = vperm.xlu0 %1448, %v1375
        %v1450 = vpop.permute.xlu0 %1449
        %1453 = vset.pattern.permute.xlu0 0
        %1454 = vperm.xlu0 %1453, %v1376
        %v1455 = vpop.permute.xlu0 %1454
        %v1457 = vsel %vm717, %v1380, 0.0
        %v1458 = vsel %vm718, %v1385, 0.0
        %v1459 = vsel %vm719, %v1390, 0.0
        %v1460 = vsel %vm720, %v1395, 0.0
        %v1461 = vsel %vm721, %v1400, 0.0
        %v1462 = vsel %vm722, %v1405, 0.0
        %v1463 = vsel %vm723, %v1410, 0.0
        %v1464 = vsel %vm724, %v1415, 0.0
        %v1465 = vsel %vm725, %v1420, 0.0
        %v1466 = vsel %vm726, %v1425, 0.0
        %v1467 = vsel %vm727, %v1430, 0.0
        %v1468 = vsel %vm728, %v1435, 0.0
        %v1469 = vsel %vm729, %v1440, 0.0
        %v1470 = vsel %vm730, %v1445, 0.0
        %v1471 = vsel %vm731, %v1450, 0.0
        %v1472 = vsel %vm732, %v1455, 0.0
        %v1473 = vsel %vm790, %v1457, 0.0
        %v1474 = vrot.slane %v1473, 4
        %v1475 = vadd.f32 %v1473, %v1474
        %v1476 = vrot.slane %v1475, 2
        %v1477 = vadd.f32 %v1475, %v1476
        %v1478 = vrot.slane %v1477, 1
        %v1479 = vadd.f32 %v1477, %v1478
        %v1480 = vsel %vm790, %v1458, 0.0
        %v1481 = vrot.slane %v1480, 4
        %v1482 = vadd.f32 %v1480, %v1481
        %v1483 = vrot.slane %v1482, 2
        %v1484 = vadd.f32 %v1482, %v1483
        %v1485 = vrot.slane %v1484, 1
        %v1486 = vadd.f32 %v1484, %v1485
        %v1487 = vsel %vm790, %v1459, 0.0
        %v1488 = vrot.slane %v1487, 4
        %v1489 = vadd.f32 %v1487, %v1488
        %v1490 = vrot.slane %v1489, 2
        %v1491 = vadd.f32 %v1489, %v1490
        %v1492 = vrot.slane %v1491, 1
        %v1493 = vadd.f32 %v1491, %v1492
        %v1494 = vsel %vm790, %v1460, 0.0
        %v1495 = vrot.slane %v1494, 4
        %v1496 = vadd.f32 %v1494, %v1495
        %v1497 = vrot.slane %v1496, 2
        %v1498 = vadd.f32 %v1496, %v1497
        %v1499 = vrot.slane %v1498, 1
        %v1500 = vadd.f32 %v1498, %v1499
        %v1501 = vsel %vm790, %v1461, 0.0
        %v1502 = vrot.slane %v1501, 4
        %v1503 = vadd.f32 %v1501, %v1502
        %v1504 = vrot.slane %v1503, 2
        %v1505 = vadd.f32 %v1503, %v1504
        %v1506 = vrot.slane %v1505, 1
        %v1507 = vadd.f32 %v1505, %v1506
        %v1508 = vsel %vm790, %v1462, 0.0
        %v1509 = vrot.slane %v1508, 4
        %v1510 = vadd.f32 %v1508, %v1509
        %v1511 = vrot.slane %v1510, 2
        %v1512 = vadd.f32 %v1510, %v1511
        %v1513 = vrot.slane %v1512, 1
        %v1514 = vadd.f32 %v1512, %v1513
        %v1515 = vsel %vm790, %v1463, 0.0
        %v1516 = vrot.slane %v1515, 4
        %v1517 = vadd.f32 %v1515, %v1516
        %v1518 = vrot.slane %v1517, 2
        %v1519 = vadd.f32 %v1517, %v1518
        %v1520 = vrot.slane %v1519, 1
        %v1521 = vadd.f32 %v1519, %v1520
        %v1522 = vsel %vm790, %v1464, 0.0
        %v1523 = vrot.slane %v1522, 4
        %v1524 = vadd.f32 %v1522, %v1523
        %v1525 = vrot.slane %v1524, 2
        %v1526 = vadd.f32 %v1524, %v1525
        %v1527 = vrot.slane %v1526, 1
        %v1528 = vadd.f32 %v1526, %v1527
        %v1529 = vsel %vm790, %v1465, 0.0
        %v1530 = vrot.slane %v1529, 4
        %v1531 = vadd.f32 %v1529, %v1530
        %v1532 = vrot.slane %v1531, 2
        %v1533 = vadd.f32 %v1531, %v1532
        %v1534 = vrot.slane %v1533, 1
        %v1535 = vadd.f32 %v1533, %v1534
        %v1536 = vsel %vm790, %v1466, 0.0
        %v1537 = vrot.slane %v1536, 4
        %v1538 = vadd.f32 %v1536, %v1537
        %v1539 = vrot.slane %v1538, 2
        %v1540 = vadd.f32 %v1538, %v1539
        %v1541 = vrot.slane %v1540, 1
        %v1542 = vadd.f32 %v1540, %v1541
        %v1543 = vsel %vm790, %v1467, 0.0
        %v1544 = vrot.slane %v1543, 4
        %v1545 = vadd.f32 %v1543, %v1544
        %v1546 = vrot.slane %v1545, 2
        %v1547 = vadd.f32 %v1545, %v1546
        %v1548 = vrot.slane %v1547, 1
        %v1549 = vadd.f32 %v1547, %v1548
        %v1550 = vsel %vm790, %v1468, 0.0
        %v1551 = vrot.slane %v1550, 4
        %v1552 = vadd.f32 %v1550, %v1551
        %v1553 = vrot.slane %v1552, 2
        %v1554 = vadd.f32 %v1552, %v1553
        %v1555 = vrot.slane %v1554, 1
        %v1556 = vadd.f32 %v1554, %v1555
        %v1557 = vsel %vm790, %v1469, 0.0
        %v1558 = vrot.slane %v1557, 4
        %v1559 = vadd.f32 %v1557, %v1558
        %v1560 = vrot.slane %v1559, 2
        %v1561 = vadd.f32 %v1559, %v1560
        %v1562 = vrot.slane %v1561, 1
        %v1563 = vadd.f32 %v1561, %v1562
        %v1564 = vsel %vm790, %v1470, 0.0
        %v1565 = vrot.slane %v1564, 4
        %v1566 = vadd.f32 %v1564, %v1565
        %v1567 = vrot.slane %v1566, 2
        %v1568 = vadd.f32 %v1566, %v1567
        %v1569 = vrot.slane %v1568, 1
        %v1570 = vadd.f32 %v1568, %v1569
        %v1571 = vsel %vm790, %v1471, 0.0
        %v1572 = vrot.slane %v1571, 4
        %v1573 = vadd.f32 %v1571, %v1572
        %v1574 = vrot.slane %v1573, 2
        %v1575 = vadd.f32 %v1573, %v1574
        %v1576 = vrot.slane %v1575, 1
        %v1577 = vadd.f32 %v1575, %v1576
        %v1578 = vsel %vm790, %v1472, 0.0
        %v1579 = vrot.slane %v1578, 4
        %v1580 = vadd.f32 %v1578, %v1579
        %v1581 = vrot.slane %v1580, 2
        %v1582 = vadd.f32 %v1580, %v1581
        %v1583 = vrot.slane %v1582, 1
        %v1584 = vadd.f32 %v1582, %v1583
        %v1585 = vld [vmem:[#allocation2] sm:$0xf]
        %v1602 = vsel %vm967, %v1486, %v1479
        %v1603 = vsel %vm969, %v1493, %v1602
        %v1604 = vsel %vm971, %v1500, %v1603
        %v1605 = vsel %vm973, %v1507, %v1604
        %v1606 = vsel %vm975, %v1514, %v1605
        %v1607 = vsel %vm977, %v1521, %v1606
        %v1608 = vsel %vm979, %v1528, %v1607
        %v1609 = vsel %vm967, %v1542, %v1535
        %v1610 = vsel %vm969, %v1549, %v1609
        %v1611 = vsel %vm971, %v1556, %v1610
        %v1612 = vsel %vm973, %v1563, %v1611
        %v1613 = vsel %vm975, %v1570, %v1612
        %v1614 = vsel %vm977, %v1577, %v1613
        %v1615 = vsel %vm979, %v1584, %v1614
        %v1617 = vsel %vm790, %v1585, 0
        %v1619 = vsel %vm790, %v1608, 0
        %v1621 = vsel %vm790, %v1615, 0
        %1623 = vmatprep.subr.mxu0 0.0
        %1624 = vmatpush1.xpose.msra.mxu0 %v1619
        %1625 = vmatprep.subr.mxu0 0.0
        %1626 = vmatpush1.xpose.msra.mxu0 %v1621
        %1627 = vmatprep.subr.mxu0 0.0
        %1628 = vmatpush1.xpose.msra.mxu0 0.0
        %1629 = vmatprep.subr.mxu0 0.0
        %1630 = vmatpush1.xpose.msra.mxu0 0.0
        %1631 = vmatprep.subr.mxu0 0.0
        %1632 = vmatpush1.xpose.msra.mxu0 0.0
        %1633 = vmatprep.subr.mxu0 0.0
        %1634 = vmatpush1.xpose.msra.mxu0 0.0
        %1635 = vmatprep.subr.mxu0 0.0
        %1636 = vmatpush1.xpose.msra.mxu0 0.0
        %1637 = vmatprep.subr.mxu0 0.0
        %1638 = vmatpush1.xpose.msra.mxu0 0.0
        %1639 = vmatprep.subr.mxu0 0.0
        %1640 = vmatpush1.xpose.msra.mxu0 0.0
        %1641 = vmatprep.subr.mxu0 0.0
        %1642 = vmatpush1.xpose.msra.mxu0 0.0
        %1643 = vmatprep.subr.mxu0 0.0
        %1644 = vmatpush1.xpose.msra.mxu0 0.0
        %1645 = vmatprep.subr.mxu0 0.0
        %1646 = vmatpush1.xpose.msra.mxu0 0.0
        %1647 = vmatprep.subr.mxu0 0.0
        %1648 = vmatpush1.xpose.msra.mxu0 0.0
        %1649 = vmatprep.subr.mxu0 0.0
        %1650 = vmatpush1.xpose.msra.mxu0 0.0
        %1651 = vmatprep.subr.mxu0 0.0
        %1652 = vmatpush1.xpose.msra.mxu0 0.0
        %1653 = vmatprep.subr.mxu0 0.0
        %1654 = vmatpush1.xpose.msra.mxu0 0.0
        %1655 = vmatprep.subr.mxu0 0.0
        %1656 = vmatpush1.xpose.msra.mxu0 0.0
        %1657 = vmatprep.subr.mxu0 0.0
        %1658 = vmatpush1.xpose.msra.mxu0 0.0
        %1659 = vmatprep.subr.mxu0 0.0
        %1660 = vmatpush1.xpose.msra.mxu0 0.0
        %1661 = vmatprep.subr.mxu0 0.0
        %1662 = vmatpush1.xpose.msra.mxu0 0.0
        %1663 = vmatprep.subr.mxu0 0.0
        %1664 = vmatpush1.xpose.msra.mxu0 0.0
        %1665 = vmatprep.subr.mxu0 0.0
        %1666 = vmatpush1.xpose.msra.mxu0 0.0
        %1667 = vmatprep.subr.mxu0 0.0
        %1668 = vmatpush1.xpose.msra.mxu0 0.0
        %1669 = vmatprep.subr.mxu0 0.0
        %1670 = vmatpush1.xpose.msra.mxu0 0.0
        %1671 = vmatprep.subr.mxu0 0.0
        %1672 = vmatpush1.xpose.msra.mxu0 0.0
        %1673 = vmatprep.subr.mxu0 0.0
        %1674 = vmatpush1.xpose.msra.mxu0 0.0
        %1675 = vmatprep.subr.mxu0 0.0
        %1676 = vmatpush1.xpose.msra.mxu0 0.0
        %1677 = vmatprep.subr.mxu0 0.0
        %1678 = vmatpush1.xpose.msra.mxu0 0.0
        %1679 = vmatprep.subr.mxu0 0.0
        %1680 = vmatpush1.xpose.msra.mxu0 0.0
        %1681 = vmatprep.subr.mxu0 0.0
        %1682 = vmatpush1.xpose.msra.mxu0 0.0
        %1683 = vmatprep.subr.mxu0 0.0
        %1684 = vmatpush1.xpose.msra.mxu0 0.0
        %1685 = vmatprep.subr.mxu0 0.0
        %1686 = vmatpush1.xpose.msra.mxu0 0.0
        %1687 = vmatprep.mubr.f32.mxu0 0.0
        %1688 = vmatmul.mubr.f32.gmra.mrb[0].mxu0 %v1617
        %v1689 = vpop.f32.mrb[0].mxu0
        %v1690 = vadd.f32 0.0, %v1689
        %v1691 = vpop.f32.mrb[0].mxu0
        %1692 = vdwg.mxu0
        %vm1693 = vcmask 125952
        %1694 = vst.msk [vmem:[%s281] sm:$0xf] %vm1693, %v1690
        %s1695 = sand.u32 %s165, 1
        %s1696 = scalar_lea.sflag [#allocation5], %s1695
        %s1697 = sand.u32 %s165, 1
        %s1698 = smul.addr %s1697, 4
        %s1699 = scalar_lea.vmem [#allocation4], %s1698
        // Predicated region
        $region45: #{tpu_custom_call.1} parent=39 // pred_check
          %p1700 = pneg %p175
        $region46: #{tpu_custom_call.1} parent=39 // pred_check_branch
          %1702 = sbr.rel (%p1700) target = $region48
        $region47: #{tpu_custom_call.1} parent=39 // pred_region
          %s1704 = ssub.s32 64, 64
          %1705 = vsyncadd %s1696, %s1704
          %s1706 = sadd.s32 %s24, %s23
          %s1707 = smul.addr %s1706, 64
          %s1708 = scalar_lea.hbm %s5, %s1707
          %s1710 = sshll.u32 %s1699, 4
          %s1711 = int_to_ptr.vmem [resolvable:$true] %s1710
          %1713 = dma.vmem_to_hbm [thread:$0]  %s1711, 64, %s1708, %s1696
        $region48: #{tpu_custom_call.1} parent=39 // pred_fallthru
          _
      $region40: #{tpu_custom_call.1} parent=5 // pred_fallthru
        _
      %p1714 = scmp.le.s32.totalorder 2, %s14
      // Predicated region
      $region49: #{tpu_custom_call.1} parent=5 // pred_check
        %p1715 = pneg %p1714
      $region50: #{tpu_custom_call.1} parent=5 // pred_check_branch
        %1717 = sbr.rel (%p1715) target = $region52
      $region51: #{tpu_custom_call.1} parent=5 // pred_region
        %s1718 = ssub.s32 %s14, 2
        // Predicated region
        $region53: #{tpu_custom_call.1} parent=51 // pred_check
          %p1719 = pneg %p181
        $region54: #{tpu_custom_call.1} parent=51 // pred_check_branch
          %1721 = sbr.rel (%p1719) target = $region56
        $region55: #{tpu_custom_call.1} parent=51 // pred_region
          %s1722 = sand.u32 %s166, 1
          %s1723 = scalar_lea.sflag [#allocation5], %s1722
          %s1724 = sand.u32 %s166, 1
          %s1725 = smul.addr %s1724, 4
          %s1726 = scalar_lea.vmem [#allocation4], %s1725
          %1727 = dma.done %s1723, 64
        $region56: #{tpu_custom_call.1} parent=51 // pred_fallthru
          _
      $region52: #{tpu_custom_call.1} parent=5 // pred_fallthru
        _
    $region6: #{tpu_custom_call.1} parent=1 // loop_footer
      %s18 = sadd.s32 1, %s14
    $region7: #{tpu_custom_call.1} parent=1 // loop_footer_branch
      %13 = sbr.rel target = $region3
    $region8: #{tpu_custom_call.1} parent=1 // loop_exit
      _
    %1728 = vsyncpa [#allocation5], 1
    %s1729 = scalar_lea.sflag [#allocation5], 1
    %1730 = vsyncpa %s1729, 1

</llo_original>
